<compile_context>
chip_gen: v6e
topology: v6e:2x2x1
jax: 0.10.0
libtpu: 0.0.40
codegen_flags: <defaults>
</compile_context>

<pallas_src>
import functools

import jax
import jax.numpy as jnp
from jax import lax
from jax.experimental import pallas as pl
from jax.experimental.pallas import tpu as pltpu


def _balrnn_kernel(ff0_ref, w_hhT_ref, hlast_ref, hT_ref, hprev_ref, *,
                   num_layers, t_chunk):
    """One grid step == one chunk of T_CHUNK timesteps (grid is sequential)."""
    c = pl.program_id(0)

    @pl.when(c == 0)
    def _():
        hprev_ref[...] = jnp.zeros_like(hprev_ref)

    # Hidden state for the chunk lives in values (vregs); one VMEM load here
    # and one store at the end of the chunk instead of per-timestep copies.
    h_init = tuple(hprev_ref[l] for l in range(num_layers))

    def step(i, h_prev):
        ff = ff0_ref[i]                                  # (B, Hp): x_t @ W_ih0.T (precomputed)
        h_cur = []
        for l in range(num_layers):                      # static unroll over layers
            w = w_hhT_ref[l]                             # (Hp, Hp), pre-transposed in wrapper
            if l == 0:
                pre = ff + jnp.dot(h_prev[0], w,
                                   preferred_element_type=jnp.float32)
            else:
                # relu(h_cur[l-1] @ W.T + h_prev[l] @ W.T)
                #   == relu((h_cur[l-1] + h_prev[l]) @ W.T)   (same W_hh[l])
                pre = jnp.dot(h_cur[l - 1] + h_prev[l], w,
                              preferred_element_type=jnp.float32)
            h_cur.append(jnp.maximum(pre, 0.0))          # ReLU transfer function
        hlast_ref[i] = h_cur[-1]                         # last-layer hidden for this t
        return tuple(h_cur)

    h_final = lax.fori_loop(0, t_chunk, step, h_init, unroll=True)

    for l in range(num_layers):
        hprev_ref[l] = h_final[l]

    @pl.when(c == pl.num_programs(0) - 1)
    def _():
        hT_ref[...] = hprev_ref[...]


def _pick_time_chunk(seq_len, cap=32):
    """Largest divisor of seq_len that is <= cap (amortizes grid-step cost)."""
    best = 1
    for d in range(1, min(seq_len, cap) + 1):
        if seq_len % d == 0:
            best = d
    return best


def _round_up(n, m):
    return ((n + m - 1) // m) * m


def balrnn_forward(x, w_ih0, w_hh, w_out, b_out):
    """x: (batch, seq, input) batch-first, float32.  Returns (y, h_T)."""
    batch, seq_len, input_size = x.shape
    num_layers, hidden_size, _ = w_hh.shape

    b_pad = _round_up(max(batch, 8), 8)             # f32 sublane = 8
    h_pad = _round_up(hidden_size, 128)              # lane-dense loads/stores/matmuls
    t_chunk = _pick_time_chunk(seq_len)

    x_tm = jnp.transpose(x, (1, 0, 2))               # (S, B, I) time-major
    if b_pad != batch:
        x_tm = jnp.pad(x_tm, ((0, 0), (0, b_pad - batch), (0, 0)))

    # Zero-pad weights to the lane-aligned hidden size (exact: padded lanes stay 0).
    w_ih0_p = jnp.pad(w_ih0, ((0, h_pad - hidden_size), (0, 0)))      # (Hp, I)
    w_hhT = jnp.transpose(w_hh, (0, 2, 1))                            # (L, H, H)
    w_hhT = jnp.pad(w_hhT, ((0, 0),
                            (0, h_pad - hidden_size),
                            (0, h_pad - hidden_size)))                # (L, Hp, Hp)

    # Hoisted layer-0 feedforward: one big XLA matmul instead of S tiny ones.
    ff0 = jnp.einsum('sbi,hi->sbh', x_tm, w_ih0_p,
                     preferred_element_type=jnp.float32)              # (S, Bp, Hp)

    kernel = functools.partial(_balrnn_kernel, num_layers=num_layers,
                               t_chunk=t_chunk)

    flops = 2 * seq_len * b_pad * h_pad * h_pad * num_layers
    bytes_accessed = 4 * (ff0.size + w_hhT.size
                          + seq_len * b_pad * h_pad
                          + num_layers * b_pad * h_pad)

    h_last, h_T = pl.pallas_call(
        kernel,
        out_shape=(
            jax.ShapeDtypeStruct((seq_len, b_pad, h_pad), jnp.float32),
            jax.ShapeDtypeStruct((num_layers, b_pad, h_pad), jnp.float32),
        ),
        grid_spec=pltpu.PrefetchScalarGridSpec(
            num_scalar_prefetch=0,
            grid=(seq_len // t_chunk,),
            in_specs=[
                pl.BlockSpec((t_chunk, b_pad, h_pad),
                             lambda c: (c, 0, 0)),
                pl.BlockSpec((num_layers, h_pad, h_pad),
                             lambda c: (0, 0, 0)),       # loop-invariant weights
            ],
            out_specs=[
                pl.BlockSpec((t_chunk, b_pad, h_pad),
                             lambda c: (c, 0, 0)),
                # constant index map -> h_T stays resident across chunks
                pl.BlockSpec((num_layers, b_pad, h_pad),
                             lambda c: (0, 0, 0)),
            ],
            scratch_shapes=[
                pltpu.VMEM((num_layers, b_pad, h_pad), jnp.float32),
            ],
        ),
        compiler_params=pltpu.CompilerParams(
            dimension_semantics=("arbitrary",),           # recurrence over time
        ),
        cost_estimate=pl.CostEstimate(flops=flops, transcendentals=0,
                                      bytes_accessed=bytes_accessed),
    )(ff0, w_hhT)

    # Hoisted output projection: one big XLA matmul after the recurrence.
    h_last = h_last[:, :, :hidden_size]                   # drop padded hidden lanes
    y_tm = jnp.einsum('sbh,ih->sbi', h_last, w_out,
                      preferred_element_type=jnp.float32) + b_out     # (S, Bp, I)

    y = jnp.transpose(y_tm[:, :batch, :], (1, 0, 2))       # back to batch-first
    h_T = h_T[:, :batch, :hidden_size]
    return y, h_T


def _reference_forward(x, w_ih0, w_hh, w_out, b_out):
    """Pure-JAX reference mirroring the PyTorch loop exactly (unfused)."""
    batch, seq_len, _ = x.shape
    num_layers, hidden_size, _ = w_hh.shape
    xs = jnp.transpose(x, (1, 0, 2))
    h_prev = jnp.zeros((num_layers, batch, hidden_size), jnp.float32)
    outs = []
    for t in range(seq_len):
        h_cur = []
        for l in range(num_layers):
            rec = h_prev[l] @ w_hh[l].T
            if l == 0:
                pre = xs[t] @ w_ih0.T + rec
            else:
                pre = h_cur[l - 1] @ w_hh[l].T + rec
            h_cur.append(jnp.maximum(pre, 0.0))
        h_prev = jnp.stack(h_cur)
        outs.append(h_cur[-1])
    out = jnp.transpose(jnp.stack(outs), (1, 0, 2))
    y = out @ w_out.T + b_out
    return y, h_prev


def make_params(key, input_size, hidden_size, num_layers, K, JI0, JII):
    """Deterministic dense stand-ins for the sparse torch parameters."""
    k_ih, k_hh, k_wo, k_bo = jax.random.split(key, 4)

    # weight_ih[0]: entries JI0/sqrt(K) at random positions, prob K/input_size
    ih_mask = (jax.random.uniform(k_ih, (hidden_size, input_size))
               <= K / input_size).astype(jnp.float32)
    w_ih0 = ih_mask * (JI0 / jnp.sqrt(jnp.float32(K)))

    # weight_hh[l]: entries JII/sqrt(K) at random positions, prob K/hidden_size
    hh_mask = (jax.random.uniform(k_hh, (num_layers, hidden_size, hidden_size))
               <= K / hidden_size).astype(jnp.float32)
    w_hh = hh_mask * (JII / jnp.sqrt(jnp.float32(K)))

    # nn.Linear(hidden_size, input_size): U(-1/sqrt(H), 1/sqrt(H))
    bound = 1.0 / jnp.sqrt(jnp.float32(hidden_size))
    w_out = jax.random.uniform(k_wo, (input_size, hidden_size),
                               minval=-bound, maxval=bound)
    b_out = jax.random.uniform(k_bo, (input_size,),
                               minval=-bound, maxval=bound)
    return (w_ih0.astype(jnp.float32), w_hh.astype(jnp.float32),
            w_out.astype(jnp.float32), b_out.astype(jnp.float32))


if __name__ == "__main__":
    # small shapes consistent with the module's forward
    batch, seq_len = 2, 8
    input_size, hidden_size, num_layers = 16, 32, 2
    K, JI0, JII = 10, 0.4, -0.1

    key = jax.random.PRNGKey(0)
    k_x, k_p = jax.random.split(key)
    x = jax.random.normal(k_x, (batch, seq_len, input_size), jnp.float32)
    w_ih0, w_hh, w_out, b_out = make_params(
        k_p, input_size, hidden_size, num_layers, K, JI0, JII)

    y, h_T = balrnn_forward(x, w_ih0, w_hh, w_out, b_out)
    jax.block_until_ready((y, h_T))

    y_ref, h_ref = _reference_forward(x, w_ih0, w_hh, w_out, b_out)
    assert y.shape == (batch, seq_len, input_size)
    assert h_T.shape == (num_layers, batch, hidden_size)
    assert jnp.allclose(y, y_ref, atol=1e-5, rtol=1e-5)
    assert jnp.allclose(h_T, h_ref, atol=1e-5, rtol=1e-5)

    print("KERNEL_OK")
</pallas_src>

<mosaic_0001>
module attributes {stable_mosaic.version = 11 : i64} {
  func.func @_balrnn_kernel(%arg0: i32, %arg1: memref<8x8x128xf32, #tpu.memory_space<vmem>>, %arg2: memref<2x128x128xf32, #tpu.memory_space<vmem>>, %arg3: memref<8x8x128xf32, #tpu.memory_space<vmem>>, %arg4: memref<2x8x128xf32, #tpu.memory_space<vmem>>, %arg5: memref<2x8x128xf32, #tpu.memory_space<vmem>>) attributes {dimension_semantics = [#tpu.dimension_semantics<arbitrary>], iteration_bounds = array<i64: 1>, scalar_prefetch = 0 : i64, scratch_operands = 1 : i64, tpu.core_type = #tpu.core_type<tc>, window_params = [{transform_indices = @transform_0, window_bounds = array<i64: 8, 8, 128>}, {pipeline_mode = #tpu.pipeline_mode<synchronous>, transform_indices = @transform_1, window_bounds = array<i64: 2, 128, 128>}, {transform_indices = @transform_2, window_bounds = array<i64: 8, 8, 128>}, {pipeline_mode = #tpu.pipeline_mode<synchronous>, transform_indices = @transform_3, window_bounds = array<i64: 2, 8, 128>}]} {
    %c0_i32 = arith.constant 0 : i32
    %0 = arith.cmpi eq, %arg0, %c0_i32 : i32
    %1 = arith.extui %0 : i1 to i32
    %c0_i32_0 = arith.constant 0 : i32
    %2 = arith.cmpi ne, %1, %c0_i32_0 : i32
    scf.if %2 {
      %cst_125 = arith.constant 0.000000e+00 : f32
      %168 = vector.broadcast %cst_125 : f32 to vector<2x8x128xf32>
      %c0_126 = arith.constant 0 : index
      %c0_127 = arith.constant 0 : index
      %c0_128 = arith.constant 0 : index
      %169 = vector.load %arg5[%c0_126, %c0_127, %c0_128] : memref<2x8x128xf32, #tpu.memory_space<vmem>>, vector<2x8x128xf32>
      tpu.vector_store %arg5[%c0_126, %c0_127, %c0_128], %168 {strides = array<i32>} : memref<2x8x128xf32, #tpu.memory_space<vmem>>, vector<2x8x128xf32>,
    } else {
    }
    %c0 = arith.constant 0 : index
    %c0_1 = arith.constant 0 : index
    %c0_2 = arith.constant 0 : index
    %3 = vector.load %arg5[%c0, %c0_1, %c0_2] : memref<2x8x128xf32, #tpu.memory_space<vmem>>, vector<1x8x128xf32>
    %4 = vector.shape_cast %3 : vector<1x8x128xf32> to vector<8x128xf32>
    %c1 = arith.constant 1 : index
    %c0_3 = arith.constant 0 : index
    %c0_4 = arith.constant 0 : index
    %5 = vector.load %arg5[%c1, %c0_3, %c0_4] : memref<2x8x128xf32, #tpu.memory_space<vmem>>, vector<1x8x128xf32>
    %6 = vector.shape_cast %5 : vector<1x8x128xf32> to vector<8x128xf32>
    %c0_i32_5 = arith.constant 0 : i32
    %7 = arith.index_cast %c0_i32_5 : i32 to index
    %c0_6 = arith.constant 0 : index
    %c0_7 = arith.constant 0 : index
    %8 = vector.load %arg1[%7, %c0_6, %c0_7] : memref<8x8x128xf32, #tpu.memory_space<vmem>>, vector<1x8x128xf32>
    %9 = vector.shape_cast %8 : vector<1x8x128xf32> to vector<8x128xf32>
    %c0_8 = arith.constant 0 : index
    %c0_9 = arith.constant 0 : index
    %c0_10 = arith.constant 0 : index
    %10 = vector.load %arg2[%c0_8, %c0_9, %c0_10] : memref<2x128x128xf32, #tpu.memory_space<vmem>>, vector<1x128x128xf32>
    %11 = vector.shape_cast %10 : vector<1x128x128xf32> to vector<128x128xf32>
    %cst = arith.constant dense<0.000000e+00> : vector<8x128xf32>
    %12 = tpu.matmul %4, %11, %cst {dimension_numbers = #tpu.dot_dimension_numbers<[1], [0], [0], [1], [0, 0, 1, 1], [], []>} : vector<8x128xf32>, vector<128x128xf32>, vector<8x128xf32> -> vector<8x128xf32>
    %13 = arith.addf %9, %12 : vector<8x128xf32>
    %cst_11 = arith.constant 0.000000e+00 : f32
    %14 = vector.broadcast %cst_11 : f32 to vector<8x128xf32>
    %15 = arith.maximumf %13, %14 : vector<8x128xf32>
    %c1_12 = arith.constant 1 : index
    %c0_13 = arith.constant 0 : index
    %c0_14 = arith.constant 0 : index
    %16 = vector.load %arg2[%c1_12, %c0_13, %c0_14] : memref<2x128x128xf32, #tpu.memory_space<vmem>>, vector<1x128x128xf32>
    %17 = vector.shape_cast %16 : vector<1x128x128xf32> to vector<128x128xf32>
    %18 = arith.addf %15, %6 : vector<8x128xf32>
    %cst_15 = arith.constant dense<0.000000e+00> : vector<8x128xf32>
    %19 = tpu.matmul %18, %17, %cst_15 {dimension_numbers = #tpu.dot_dimension_numbers<[1], [0], [0], [1], [0, 0, 1, 1], [], []>} : vector<8x128xf32>, vector<128x128xf32>, vector<8x128xf32> -> vector<8x128xf32>
    %cst_16 = arith.constant 0.000000e+00 : f32
    %20 = vector.broadcast %cst_16 : f32 to vector<8x128xf32>
    %21 = arith.maximumf %19, %20 : vector<8x128xf32>
    %22 = arith.index_cast %c0_i32_5 : i32 to index
    %c0_17 = arith.constant 0 : index
    %c0_18 = arith.constant 0 : index
    %23 = vector.load %arg3[%22, %c0_17, %c0_18] : memref<8x8x128xf32, #tpu.memory_space<vmem>>, vector<1x8x128xf32>
    %24 = vector.shape_cast %23 : vector<1x8x128xf32> to vector<8x128xf32>
    %25 = vector.shape_cast %21 : vector<8x128xf32> to vector<1x8x128xf32>
    tpu.vector_store %arg3[%22, %c0_17, %c0_18], %25 {strides = array<i32>} : memref<8x8x128xf32, #tpu.memory_space<vmem>>, vector<1x8x128xf32>,
    %c1_i32 = arith.constant 1 : i32
    %26 = arith.index_cast %c1_i32 : i32 to index
    %c0_19 = arith.constant 0 : index
    %c0_20 = arith.constant 0 : index
    %27 = vector.load %arg1[%26, %c0_19, %c0_20] : memref<8x8x128xf32, #tpu.memory_space<vmem>>, vector<1x8x128xf32>
    %28 = vector.shape_cast %27 : vector<1x8x128xf32> to vector<8x128xf32>
    %c0_21 = arith.constant 0 : index
    %c0_22 = arith.constant 0 : index
    %c0_23 = arith.constant 0 : index
    %29 = vector.load %arg2[%c0_21, %c0_22, %c0_23] : memref<2x128x128xf32, #tpu.memory_space<vmem>>, vector<1x128x128xf32>
    %30 = vector.shape_cast %29 : vector<1x128x128xf32> to vector<128x128xf32>
    %cst_24 = arith.constant dense<0.000000e+00> : vector<8x128xf32>
    %31 = tpu.matmul %15, %30, %cst_24 {dimension_numbers = #tpu.dot_dimension_numbers<[1], [0], [0], [1], [0, 0, 1, 1], [], []>} : vector<8x128xf32>, vector<128x128xf32>, vector<8x128xf32> -> vector<8x128xf32>
    %32 = arith.addf %28, %31 : vector<8x128xf32>
    %cst_25 = arith.constant 0.000000e+00 : f32
    %33 = vector.broadcast %cst_25 : f32 to vector<8x128xf32>
    %34 = arith.maximumf %32, %33 : vector<8x128xf32>
    %c1_26 = arith.constant 1 : index
    %c0_27 = arith.constant 0 : index
    %c0_28 = arith.constant 0 : index
    %35 = vector.load %arg2[%c1_26, %c0_27, %c0_28] : memref<2x128x128xf32, #tpu.memory_space<vmem>>, vector<1x128x128xf32>
    %36 = vector.shape_cast %35 : vector<1x128x128xf32> to vector<128x128xf32>
    %37 = arith.addf %34, %21 : vector<8x128xf32>
    %cst_29 = arith.constant dense<0.000000e+00> : vector<8x128xf32>
    %38 = tpu.matmul %37, %36, %cst_29 {dimension_numbers = #tpu.dot_dimension_numbers<[1], [0], [0], [1], [0, 0, 1, 1], [], []>} : vector<8x128xf32>, vector<128x128xf32>, vector<8x128xf32> -> vector<8x128xf32>
    %cst_30 = arith.constant 0.000000e+00 : f32
    %39 = vector.broadcast %cst_30 : f32 to vector<8x128xf32>
    %40 = arith.maximumf %38, %39 : vector<8x128xf32>
    %41 = arith.index_cast %c1_i32 : i32 to index
    %c0_31 = arith.constant 0 : index
    %c0_32 = arith.constant 0 : index
    %42 = vector.load %arg3[%41, %c0_31, %c0_32] : memref<8x8x128xf32, #tpu.memory_space<vmem>>, vector<1x8x128xf32>
    %43 = vector.shape_cast %42 : vector<1x8x128xf32> to vector<8x128xf32>
    %44 = vector.shape_cast %40 : vector<8x128xf32> to vector<1x8x128xf32>
    tpu.vector_store %arg3[%41, %c0_31, %c0_32], %44 {strides = array<i32>} : memref<8x8x128xf32, #tpu.memory_space<vmem>>, vector<1x8x128xf32>,
    %c2_i32 = arith.constant 2 : i32
    %45 = arith.index_cast %c2_i32 : i32 to index
    %c0_33 = arith.constant 0 : index
    %c0_34 = arith.constant 0 : index
    %46 = vector.load %arg1[%45, %c0_33, %c0_34] : memref<8x8x128xf32, #tpu.memory_space<vmem>>, vector<1x8x128xf32>
    %47 = vector.shape_cast %46 : vector<1x8x128xf32> to vector<8x128xf32>
    %c0_35 = arith.constant 0 : index
    %c0_36 = arith.constant 0 : index
    %c0_37 = arith.constant 0 : index
    %48 = vector.load %arg2[%c0_35, %c0_36, %c0_37] : memref<2x128x128xf32, #tpu.memory_space<vmem>>, vector<1x128x128xf32>
    %49 = vector.shape_cast %48 : vector<1x128x128xf32> to vector<128x128xf32>
    %cst_38 = arith.constant dense<0.000000e+00> : vector<8x128xf32>
    %50 = tpu.matmul %34, %49, %cst_38 {dimension_numbers = #tpu.dot_dimension_numbers<[1], [0], [0], [1], [0, 0, 1, 1], [], []>} : vector<8x128xf32>, vector<128x128xf32>, vector<8x128xf32> -> vector<8x128xf32>
    %51 = arith.addf %47, %50 : vector<8x128xf32>
    %cst_39 = arith.constant 0.000000e+00 : f32
    %52 = vector.broadcast %cst_39 : f32 to vector<8x128xf32>
    %53 = arith.maximumf %51, %52 : vector<8x128xf32>
    %c1_40 = arith.constant 1 : index
    %c0_41 = arith.constant 0 : index
    %c0_42 = arith.constant 0 : index
    %54 = vector.load %arg2[%c1_40, %c0_41, %c0_42] : memref<2x128x128xf32, #tpu.memory_space<vmem>>, vector<1x128x128xf32>
    %55 = vector.shape_cast %54 : vector<1x128x128xf32> to vector<128x128xf32>
    %56 = arith.addf %53, %40 : vector<8x128xf32>
    %cst_43 = arith.constant dense<0.000000e+00> : vector<8x128xf32>
    %57 = tpu.matmul %56, %55, %cst_43 {dimension_numbers = #tpu.dot_dimension_numbers<[1], [0], [0], [1], [0, 0, 1, 1], [], []>} : vector<8x128xf32>, vector<128x128xf32>, vector<8x128xf32> -> vector<8x128xf32>
    %cst_44 = arith.constant 0.000000e+00 : f32
    %58 = vector.broadcast %cst_44 : f32 to vector<8x128xf32>
    %59 = arith.maximumf %57, %58 : vector<8x128xf32>
    %60 = arith.index_cast %c2_i32 : i32 to index
    %c0_45 = arith.constant 0 : index
    %c0_46 = arith.constant 0 : index
    %61 = vector.load %arg3[%60, %c0_45, %c0_46] : memref<8x8x128xf32, #tpu.memory_space<vmem>>, vector<1x8x128xf32>
    %62 = vector.shape_cast %61 : vector<1x8x128xf32> to vector<8x128xf32>
    %63 = vector.shape_cast %59 : vector<8x128xf32> to vector<1x8x128xf32>
    tpu.vector_store %arg3[%60, %c0_45, %c0_46], %63 {strides = array<i32>} : memref<8x8x128xf32, #tpu.memory_space<vmem>>, vector<1x8x128xf32>,
    %c3_i32 = arith.constant 3 : i32
    %64 = arith.index_cast %c3_i32 : i32 to index
    %c0_47 = arith.constant 0 : index
    %c0_48 = arith.constant 0 : index
    %65 = vector.load %arg1[%64, %c0_47, %c0_48] : memref<8x8x128xf32, #tpu.memory_space<vmem>>, vector<1x8x128xf32>
    %66 = vector.shape_cast %65 : vector<1x8x128xf32> to vector<8x128xf32>
    %c0_49 = arith.constant 0 : index
    %c0_50 = arith.constant 0 : index
    %c0_51 = arith.constant 0 : index
    %67 = vector.load %arg2[%c0_49, %c0_50, %c0_51] : memref<2x128x128xf32, #tpu.memory_space<vmem>>, vector<1x128x128xf32>
    %68 = vector.shape_cast %67 : vector<1x128x128xf32> to vector<128x128xf32>
    %cst_52 = arith.constant dense<0.000000e+00> : vector<8x128xf32>
    %69 = tpu.matmul %53, %68, %cst_52 {dimension_numbers = #tpu.dot_dimension_numbers<[1], [0], [0], [1], [0, 0, 1, 1], [], []>} : vector<8x128xf32>, vector<128x128xf32>, vector<8x128xf32> -> vector<8x128xf32>
    %70 = arith.addf %66, %69 : vector<8x128xf32>
    %cst_53 = arith.constant 0.000000e+00 : f32
    %71 = vector.broadcast %cst_53 : f32 to vector<8x128xf32>
    %72 = arith.maximumf %70, %71 : vector<8x128xf32>
    %c1_54 = arith.constant 1 : index
    %c0_55 = arith.constant 0 : index
    %c0_56 = arith.constant 0 : index
    %73 = vector.load %arg2[%c1_54, %c0_55, %c0_56] : memref<2x128x128xf32, #tpu.memory_space<vmem>>, vector<1x128x128xf32>
    %74 = vector.shape_cast %73 : vector<1x128x128xf32> to vector<128x128xf32>
    %75 = arith.addf %72, %59 : vector<8x128xf32>
    %cst_57 = arith.constant dense<0.000000e+00> : vector<8x128xf32>
    %76 = tpu.matmul %75, %74, %cst_57 {dimension_numbers = #tpu.dot_dimension_numbers<[1], [0], [0], [1], [0, 0, 1, 1], [], []>} : vector<8x128xf32>, vector<128x128xf32>, vector<8x128xf32> -> vector<8x128xf32>
    %cst_58 = arith.constant 0.000000e+00 : f32
    %77 = vector.broadcast %cst_58 : f32 to vector<8x128xf32>
    %78 = arith.maximumf %76, %77 : vector<8x128xf32>
    %79 = arith.index_cast %c3_i32 : i32 to index
    %c0_59 = arith.constant 0 : index
    %c0_60 = arith.constant 0 : index
    %80 = vector.load %arg3[%79, %c0_59, %c0_60] : memref<8x8x128xf32, #tpu.memory_space<vmem>>, vector<1x8x128xf32>
    %81 = vector.shape_cast %80 : vector<1x8x128xf32> to vector<8x128xf32>
    %82 = vector.shape_cast %78 : vector<8x128xf32> to vector<1x8x128xf32>
    tpu.vector_store %arg3[%79, %c0_59, %c0_60], %82 {strides = array<i32>} : memref<8x8x128xf32, #tpu.memory_space<vmem>>, vector<1x8x128xf32>,
    %c4_i32 = arith.constant 4 : i32
    %83 = arith.index_cast %c4_i32 : i32 to index
    %c0_61 = arith.constant 0 : index
    %c0_62 = arith.constant 0 : index
    %84 = vector.load %arg1[%83, %c0_61, %c0_62] : memref<8x8x128xf32, #tpu.memory_space<vmem>>, vector<1x8x128xf32>
    %85 = vector.shape_cast %84 : vector<1x8x128xf32> to vector<8x128xf32>
    %c0_63 = arith.constant 0 : index
    %c0_64 = arith.constant 0 : index
    %c0_65 = arith.constant 0 : index
    %86 = vector.load %arg2[%c0_63, %c0_64, %c0_65] : memref<2x128x128xf32, #tpu.memory_space<vmem>>, vector<1x128x128xf32>
    %87 = vector.shape_cast %86 : vector<1x128x128xf32> to vector<128x128xf32>
    %cst_66 = arith.constant dense<0.000000e+00> : vector<8x128xf32>
    %88 = tpu.matmul %72, %87, %cst_66 {dimension_numbers = #tpu.dot_dimension_numbers<[1], [0], [0], [1], [0, 0, 1, 1], [], []>} : vector<8x128xf32>, vector<128x128xf32>, vector<8x128xf32> -> vector<8x128xf32>
    %89 = arith.addf %85, %88 : vector<8x128xf32>
    %cst_67 = arith.constant 0.000000e+00 : f32
    %90 = vector.broadcast %cst_67 : f32 to vector<8x128xf32>
    %91 = arith.maximumf %89, %90 : vector<8x128xf32>
    %c1_68 = arith.constant 1 : index
    %c0_69 = arith.constant 0 : index
    %c0_70 = arith.constant 0 : index
    %92 = vector.load %arg2[%c1_68, %c0_69, %c0_70] : memref<2x128x128xf32, #tpu.memory_space<vmem>>, vector<1x128x128xf32>
    %93 = vector.shape_cast %92 : vector<1x128x128xf32> to vector<128x128xf32>
    %94 = arith.addf %91, %78 : vector<8x128xf32>
    %cst_71 = arith.constant dense<0.000000e+00> : vector<8x128xf32>
    %95 = tpu.matmul %94, %93, %cst_71 {dimension_numbers = #tpu.dot_dimension_numbers<[1], [0], [0], [1], [0, 0, 1, 1], [], []>} : vector<8x128xf32>, vector<128x128xf32>, vector<8x128xf32> -> vector<8x128xf32>
    %cst_72 = arith.constant 0.000000e+00 : f32
    %96 = vector.broadcast %cst_72 : f32 to vector<8x128xf32>
    %97 = arith.maximumf %95, %96 : vector<8x128xf32>
    %98 = arith.index_cast %c4_i32 : i32 to index
    %c0_73 = arith.constant 0 : index
    %c0_74 = arith.constant 0 : index
    %99 = vector.load %arg3[%98, %c0_73, %c0_74] : memref<8x8x128xf32, #tpu.memory_space<vmem>>, vector<1x8x128xf32>
    %100 = vector.shape_cast %99 : vector<1x8x128xf32> to vector<8x128xf32>
    %101 = vector.shape_cast %97 : vector<8x128xf32> to vector<1x8x128xf32>
    tpu.vector_store %arg3[%98, %c0_73, %c0_74], %101 {strides = array<i32>} : memref<8x8x128xf32, #tpu.memory_space<vmem>>, vector<1x8x128xf32>,
    %c5_i32 = arith.constant 5 : i32
    %102 = arith.index_cast %c5_i32 : i32 to index
    %c0_75 = arith.constant 0 : index
    %c0_76 = arith.constant 0 : index
    %103 = vector.load %arg1[%102, %c0_75, %c0_76] : memref<8x8x128xf32, #tpu.memory_space<vmem>>, vector<1x8x128xf32>
    %104 = vector.shape_cast %103 : vector<1x8x128xf32> to vector<8x128xf32>
    %c0_77 = arith.constant 0 : index
    %c0_78 = arith.constant 0 : index
    %c0_79 = arith.constant 0 : index
    %105 = vector.load %arg2[%c0_77, %c0_78, %c0_79] : memref<2x128x128xf32, #tpu.memory_space<vmem>>, vector<1x128x128xf32>
    %106 = vector.shape_cast %105 : vector<1x128x128xf32> to vector<128x128xf32>
    %cst_80 = arith.constant dense<0.000000e+00> : vector<8x128xf32>
    %107 = tpu.matmul %91, %106, %cst_80 {dimension_numbers = #tpu.dot_dimension_numbers<[1], [0], [0], [1], [0, 0, 1, 1], [], []>} : vector<8x128xf32>, vector<128x128xf32>, vector<8x128xf32> -> vector<8x128xf32>
    %108 = arith.addf %104, %107 : vector<8x128xf32>
    %cst_81 = arith.constant 0.000000e+00 : f32
    %109 = vector.broadcast %cst_81 : f32 to vector<8x128xf32>
    %110 = arith.maximumf %108, %109 : vector<8x128xf32>
    %c1_82 = arith.constant 1 : index
    %c0_83 = arith.constant 0 : index
    %c0_84 = arith.constant 0 : index
    %111 = vector.load %arg2[%c1_82, %c0_83, %c0_84] : memref<2x128x128xf32, #tpu.memory_space<vmem>>, vector<1x128x128xf32>
    %112 = vector.shape_cast %111 : vector<1x128x128xf32> to vector<128x128xf32>
    %113 = arith.addf %110, %97 : vector<8x128xf32>
    %cst_85 = arith.constant dense<0.000000e+00> : vector<8x128xf32>
    %114 = tpu.matmul %113, %112, %cst_85 {dimension_numbers = #tpu.dot_dimension_numbers<[1], [0], [0], [1], [0, 0, 1, 1], [], []>} : vector<8x128xf32>, vector<128x128xf32>, vector<8x128xf32> -> vector<8x128xf32>
    %cst_86 = arith.constant 0.000000e+00 : f32
    %115 = vector.broadcast %cst_86 : f32 to vector<8x128xf32>
    %116 = arith.maximumf %114, %115 : vector<8x128xf32>
    %117 = arith.index_cast %c5_i32 : i32 to index
    %c0_87 = arith.constant 0 : index
    %c0_88 = arith.constant 0 : index
    %118 = vector.load %arg3[%117, %c0_87, %c0_88] : memref<8x8x128xf32, #tpu.memory_space<vmem>>, vector<1x8x128xf32>
    %119 = vector.shape_cast %118 : vector<1x8x128xf32> to vector<8x128xf32>
    %120 = vector.shape_cast %116 : vector<8x128xf32> to vector<1x8x128xf32>
    tpu.vector_store %arg3[%117, %c0_87, %c0_88], %120 {strides = array<i32>} : memref<8x8x128xf32, #tpu.memory_space<vmem>>, vector<1x8x128xf32>,
    %c6_i32 = arith.constant 6 : i32
    %121 = arith.index_cast %c6_i32 : i32 to index
    %c0_89 = arith.constant 0 : index
    %c0_90 = arith.constant 0 : index
    %122 = vector.load %arg1[%121, %c0_89, %c0_90] : memref<8x8x128xf32, #tpu.memory_space<vmem>>, vector<1x8x128xf32>
    %123 = vector.shape_cast %122 : vector<1x8x128xf32> to vector<8x128xf32>
    %c0_91 = arith.constant 0 : index
    %c0_92 = arith.constant 0 : index
    %c0_93 = arith.constant 0 : index
    %124 = vector.load %arg2[%c0_91, %c0_92, %c0_93] : memref<2x128x128xf32, #tpu.memory_space<vmem>>, vector<1x128x128xf32>
    %125 = vector.shape_cast %124 : vector<1x128x128xf32> to vector<128x128xf32>
    %cst_94 = arith.constant dense<0.000000e+00> : vector<8x128xf32>
    %126 = tpu.matmul %110, %125, %cst_94 {dimension_numbers = #tpu.dot_dimension_numbers<[1], [0], [0], [1], [0, 0, 1, 1], [], []>} : vector<8x128xf32>, vector<128x128xf32>, vector<8x128xf32> -> vector<8x128xf32>
    %127 = arith.addf %123, %126 : vector<8x128xf32>
    %cst_95 = arith.constant 0.000000e+00 : f32
    %128 = vector.broadcast %cst_95 : f32 to vector<8x128xf32>
    %129 = arith.maximumf %127, %128 : vector<8x128xf32>
    %c1_96 = arith.constant 1 : index
    %c0_97 = arith.constant 0 : index
    %c0_98 = arith.constant 0 : index
    %130 = vector.load %arg2[%c1_96, %c0_97, %c0_98] : memref<2x128x128xf32, #tpu.memory_space<vmem>>, vector<1x128x128xf32>
    %131 = vector.shape_cast %130 : vector<1x128x128xf32> to vector<128x128xf32>
    %132 = arith.addf %129, %116 : vector<8x128xf32>
    %cst_99 = arith.constant dense<0.000000e+00> : vector<8x128xf32>
    %133 = tpu.matmul %132, %131, %cst_99 {dimension_numbers = #tpu.dot_dimension_numbers<[1], [0], [0], [1], [0, 0, 1, 1], [], []>} : vector<8x128xf32>, vector<128x128xf32>, vector<8x128xf32> -> vector<8x128xf32>
    %cst_100 = arith.constant 0.000000e+00 : f32
    %134 = vector.broadcast %cst_100 : f32 to vector<8x128xf32>
    %135 = arith.maximumf %133, %134 : vector<8x128xf32>
    %136 = arith.index_cast %c6_i32 : i32 to index
    %c0_101 = arith.constant 0 : index
    %c0_102 = arith.constant 0 : index
    %137 = vector.load %arg3[%136, %c0_101, %c0_102] : memref<8x8x128xf32, #tpu.memory_space<vmem>>, vector<1x8x128xf32>
    %138 = vector.shape_cast %137 : vector<1x8x128xf32> to vector<8x128xf32>
    %139 = vector.shape_cast %135 : vector<8x128xf32> to vector<1x8x128xf32>
    tpu.vector_store %arg3[%136, %c0_101, %c0_102], %139 {strides = array<i32>} : memref<8x8x128xf32, #tpu.memory_space<vmem>>, vector<1x8x128xf32>,
    %c7_i32 = arith.constant 7 : i32
    %140 = arith.index_cast %c7_i32 : i32 to index
    %c0_103 = arith.constant 0 : index
    %c0_104 = arith.constant 0 : index
    %141 = vector.load %arg1[%140, %c0_103, %c0_104] : memref<8x8x128xf32, #tpu.memory_space<vmem>>, vector<1x8x128xf32>
    %142 = vector.shape_cast %141 : vector<1x8x128xf32> to vector<8x128xf32>
    %c0_105 = arith.constant 0 : index
    %c0_106 = arith.constant 0 : index
    %c0_107 = arith.constant 0 : index
    %143 = vector.load %arg2[%c0_105, %c0_106, %c0_107] : memref<2x128x128xf32, #tpu.memory_space<vmem>>, vector<1x128x128xf32>
    %144 = vector.shape_cast %143 : vector<1x128x128xf32> to vector<128x128xf32>
    %cst_108 = arith.constant dense<0.000000e+00> : vector<8x128xf32>
    %145 = tpu.matmul %129, %144, %cst_108 {dimension_numbers = #tpu.dot_dimension_numbers<[1], [0], [0], [1], [0, 0, 1, 1], [], []>} : vector<8x128xf32>, vector<128x128xf32>, vector<8x128xf32> -> vector<8x128xf32>
    %146 = arith.addf %142, %145 : vector<8x128xf32>
    %cst_109 = arith.constant 0.000000e+00 : f32
    %147 = vector.broadcast %cst_109 : f32 to vector<8x128xf32>
    %148 = arith.maximumf %146, %147 : vector<8x128xf32>
    %c1_110 = arith.constant 1 : index
    %c0_111 = arith.constant 0 : index
    %c0_112 = arith.constant 0 : index
    %149 = vector.load %arg2[%c1_110, %c0_111, %c0_112] : memref<2x128x128xf32, #tpu.memory_space<vmem>>, vector<1x128x128xf32>
    %150 = vector.shape_cast %149 : vector<1x128x128xf32> to vector<128x128xf32>
    %151 = arith.addf %148, %135 : vector<8x128xf32>
    %cst_113 = arith.constant dense<0.000000e+00> : vector<8x128xf32>
    %152 = tpu.matmul %151, %150, %cst_113 {dimension_numbers = #tpu.dot_dimension_numbers<[1], [0], [0], [1], [0, 0, 1, 1], [], []>} : vector<8x128xf32>, vector<128x128xf32>, vector<8x128xf32> -> vector<8x128xf32>
    %cst_114 = arith.constant 0.000000e+00 : f32
    %153 = vector.broadcast %cst_114 : f32 to vector<8x128xf32>
    %154 = arith.maximumf %152, %153 : vector<8x128xf32>
    %155 = arith.index_cast %c7_i32 : i32 to index
    %c0_115 = arith.constant 0 : index
    %c0_116 = arith.constant 0 : index
    %156 = vector.load %arg3[%155, %c0_115, %c0_116] : memref<8x8x128xf32, #tpu.memory_space<vmem>>, vector<1x8x128xf32>
    %157 = vector.shape_cast %156 : vector<1x8x128xf32> to vector<8x128xf32>
    %158 = vector.shape_cast %154 : vector<8x128xf32> to vector<1x8x128xf32>
    tpu.vector_store %arg3[%155, %c0_115, %c0_116], %158 {strides = array<i32>} : memref<8x8x128xf32, #tpu.memory_space<vmem>>, vector<1x8x128xf32>,
    %c8_i32 = arith.constant 8 : i32
    %c0_117 = arith.constant 0 : index
    %c0_118 = arith.constant 0 : index
    %c0_119 = arith.constant 0 : index
    %159 = vector.load %arg5[%c0_117, %c0_118, %c0_119] : memref<2x8x128xf32, #tpu.memory_space<vmem>>, vector<1x8x128xf32>
    %160 = vector.shape_cast %159 : vector<1x8x128xf32> to vector<8x128xf32>
    %161 = vector.shape_cast %148 : vector<8x128xf32> to vector<1x8x128xf32>
    tpu.vector_store %arg5[%c0_117, %c0_118, %c0_119], %161 {strides = array<i32>} : memref<2x8x128xf32, #tpu.memory_space<vmem>>, vector<1x8x128xf32>,
    %c1_120 = arith.constant 1 : index
    %c0_121 = arith.constant 0 : index
    %c0_122 = arith.constant 0 : index
    %162 = vector.load %arg5[%c1_120, %c0_121, %c0_122] : memref<2x8x128xf32, #tpu.memory_space<vmem>>, vector<1x8x128xf32>
    %163 = vector.shape_cast %162 : vector<1x8x128xf32> to vector<8x128xf32>
    %164 = vector.shape_cast %154 : vector<8x128xf32> to vector<1x8x128xf32>
    tpu.vector_store %arg5[%c1_120, %c0_121, %c0_122], %164 {strides = array<i32>} : memref<2x8x128xf32, #tpu.memory_space<vmem>>, vector<1x8x128xf32>,
    %c0_i32_123 = arith.constant 0 : i32
    %165 = arith.cmpi eq, %arg0, %c0_i32_123 : i32
    %166 = arith.extui %165 : i1 to i32
    %c0_i32_124 = arith.constant 0 : i32
    %167 = arith.cmpi ne, %166, %c0_i32_124 : i32
    scf.if %167 {
      %c0_125 = arith.constant 0 : index
      %c0_126 = arith.constant 0 : index
      %c0_127 = arith.constant 0 : index
      %168 = vector.load %arg5[%c0_125, %c0_126, %c0_127] : memref<2x8x128xf32, #tpu.memory_space<vmem>>, vector<2x8x128xf32>
      %c0_128 = arith.constant 0 : index
      %c0_129 = arith.constant 0 : index
      %c0_130 = arith.constant 0 : index
      %169 = vector.load %arg4[%c0_128, %c0_129, %c0_130] : memref<2x8x128xf32, #tpu.memory_space<vmem>>, vector<2x8x128xf32>
      tpu.vector_store %arg4[%c0_128, %c0_129, %c0_130], %168 {strides = array<i32>} : memref<2x8x128xf32, #tpu.memory_space<vmem>>, vector<2x8x128xf32>,
    } else {
    }
    return
  }
  func.func @transform_0(%arg0: i32) -> (i32, i32, i32) {
    %c0_i32 = arith.constant 0 : i32
    %c0_i32_0 = arith.constant 0 : i32
    %c0_i32_1 = arith.constant 0 : i32
    return %arg0, %c0_i32, %c0_i32_0 : i32, i32, i32
  }
  func.func @transform_1(%arg0: i32) -> (i32, i32, i32) {
    %c0_i32 = arith.constant 0 : i32
    %c0_i32_0 = arith.constant 0 : i32
    %c0_i32_1 = arith.constant 0 : i32
    %c0_i32_2 = arith.constant 0 : i32
    return %c0_i32, %c0_i32_0, %c0_i32_1 : i32, i32, i32
  }
  func.func @transform_2(%arg0: i32) -> (i32, i32, i32) {
    %c0_i32 = arith.constant 0 : i32
    %c0_i32_0 = arith.constant 0 : i32
    %c0_i32_1 = arith.constant 0 : i32
    return %arg0, %c0_i32, %c0_i32_0 : i32, i32, i32
  }
  func.func @transform_3(%arg0: i32) -> (i32, i32, i32) {
    %c0_i32 = arith.constant 0 : i32
    %c0_i32_0 = arith.constant 0 : i32
    %c0_i32_1 = arith.constant 0 : i32
    %c0_i32_2 = arith.constant 0 : i32
    return %c0_i32, %c0_i32_0, %c0_i32_1 : i32, i32, i32
  }
}

</mosaic_0001>

<llo_original>
// kernel: tpu_custom_call.1
$region0: #{tpu_custom_call.1}
  #allocation0 [shape = 'u32[]', space=smem, size = 0x4, offset = 0x4, fixed_abs, tag = 'smem constant byte address 0x4 - core index']
  #allocation1 [shape = 'u32[144,128]{1,0:T(1,128)}', space=vmem, size = 0x12000, scoped, tag = 'internal scratch']
  #allocation2 [shape = 'f32[2,8,128]{2,1,0:T(8,128)}', space=vmem, size = 0x2000, scoped, tag = 'scratch operand']
  %s0 = inlined_call_operand.hbm [shape: f32[8,8,128], index: 0, kind: input, shape index: {}]
  %s1 = inlined_call_operand.hbm [shape: f32[2,128,128], index: 1, kind: input, shape index: {}]
  %s2 = inlined_call_operand.hbm [shape: f32[8,8,128], index: 2, kind: output, shape index: {0}]
  %s3 = inlined_call_operand.hbm [shape: f32[2,8,128], index: 3, kind: output, shape index: {1}]
  %4 = xla_tuple %s2, %s3
  %s5 = sld [smem:[#allocation0]]
  $region42: #{tpu_custom_call.1} parent=0
    _
  %s7 = ssub.s32 1, %s5
  %s8 = scalar_select 0, %s7, %s5
  $region1: #{tpu_custom_call.1} parent=0
    #allocation3 [shape = 'u8[32768]{0}', space=vmem, size = 0x8000, scoped, tag = 'input window, operand 0, single buffered']
    #allocation4 [shape = 's32[1]{0}', space=sflag, size = 0x4, scoped, tag = 'scoped memory for tpu_custom_call.1']
    #allocation5 [shape = 's32[1]{0}', space=sflag, size = 0x4, scoped, tag = 'scoped memory for tpu_custom_call.1']
    #allocation6 [shape = 'u8[131072]{0}', space=vmem, size = 0x20000, scoped, tag = 'input window, operand 1, single buffered']
    #allocation7 [shape = 's32[1]{0}', space=sflag, size = 0x4, scoped, tag = 'scoped memory for tpu_custom_call.1']
    #allocation8 [shape = 'u8[32768]{0}', space=vmem, size = 0x8000, scoped, tag = 'output window, operand 0, single buffered']
    #allocation9 [shape = 'u8[8192]{0}', space=vmem, size = 0x2000, scoped, tag = 'output window, operand 1, single buffered']
    #allocation10 [shape = 's32[1]{0}', space=sflag, size = 0x4, scoped, tag = 'scoped memory for tpu_custom_call.1']
    %9 = vsyncpa [#allocation4], 0
    %10 = vsyncpa [#allocation7], 0
    %11 = vsyncpa [#allocation5], 0
    %12 = vsyncpa [#allocation10], 0
    // Predicated region
    $region2: #{tpu_custom_call.1} parent=1 // pred_check
      _
    $region3: #{tpu_custom_call.1} parent=1 // pred_check_branch
      %14 = sbr.rel (0) target = $region5
    $region4: #{tpu_custom_call.1} parent=1 // pred_region
      %s16 = ssub.s32 1024, 1024
      %17 = vsyncadd [#allocation4], %s16
      %s18 = sshll.u32 [#allocation3], 4
      %s19 = int_to_ptr.vmem [resolvable:$true] %s18
      %24 = dma.hbm_to_vmem [thread:$0]  %s0, 1024, %s19, [#allocation4], 128, 128, 8
    $region5: #{tpu_custom_call.1} parent=1 // pred_fallthru
      _
    // Predicated region
    $region6: #{tpu_custom_call.1} parent=1 // pred_check
      _
    $region7: #{tpu_custom_call.1} parent=1 // pred_check_branch
      %26 = sbr.rel (0) target = $region9
    $region8: #{tpu_custom_call.1} parent=1 // pred_region
      %s28 = ssub.s32 4096, 4096
      %29 = vsyncadd [#allocation7], %s28
      %s30 = sshll.u32 [#allocation6], 4
      %s31 = int_to_ptr.vmem [resolvable:$true] %s30
      %36 = dma.hbm_to_vmem [thread:$0]  %s1, 4096, %s31, [#allocation7], 128, 128, 8
    $region9: #{tpu_custom_call.1} parent=1 // pred_fallthru
      _
    // Predicated region
    $region10: #{tpu_custom_call.1} parent=1 // pred_check
      _
    $region11: #{tpu_custom_call.1} parent=1 // pred_check_branch
      %38 = sbr.rel (0) target = $region13
    $region12: #{tpu_custom_call.1} parent=1 // pred_region
      %39 = dma.done [#allocation4], 1024
    $region13: #{tpu_custom_call.1} parent=1 // pred_fallthru
      _
    // Predicated region
    $region14: #{tpu_custom_call.1} parent=1 // pred_check
      _
    $region15: #{tpu_custom_call.1} parent=1 // pred_check_branch
      %41 = sbr.rel (0) target = $region17
    $region16: #{tpu_custom_call.1} parent=1 // pred_region
      %42 = dma.done [#allocation7], 4096
    $region17: #{tpu_custom_call.1} parent=1 // pred_fallthru
      _
    %p43 = scmp.eq.s32.totalorder 0, 0
    // Predicated region
    $region18: #{tpu_custom_call.1} parent=1 // pred_check
      %p44 = pneg %p43
    $region19: #{tpu_custom_call.1} parent=1 // pred_check_branch
      %46 = sbr.rel (%p44) target = $region21
    $region20: #{tpu_custom_call.1} parent=1 // pred_region
      %47 = vst [vmem:[#allocation2] sm:$0xff] 0.0
      %48 = vst [vmem:[#allocation2 + $0x8] sm:$0xff] 0.0
    $region21: #{tpu_custom_call.1} parent=1 // pred_fallthru
      _
    %v49 = vld [vmem:[#allocation2] sm:$0xff]
    %s50 = scalar_lea.vmem [#allocation2], 8
    %v51 = vld [vmem:[%s50] sm:$0xff]
    %v52 = vld [vmem:[#allocation3] sm:$0xff]
    %v53 = vld [vmem:[#allocation6] sm:$0xff]
    %v54 = vld [vmem:[#allocation6 + $0x8] sm:$0xff]
    %v55 = vld [vmem:[#allocation6 + $0x10] sm:$0xff]
    %v56 = vld [vmem:[#allocation6 + $0x18] sm:$0xff]
    %v57 = vld [vmem:[#allocation6 + $0x20] sm:$0xff]
    %v58 = vld [vmem:[#allocation6 + $0x28] sm:$0xff]
    %v59 = vld [vmem:[#allocation6 + $0x30] sm:$0xff]
    %v60 = vld [vmem:[#allocation6 + $0x38] sm:$0xff]
    %v61 = vld [vmem:[#allocation6 + $0x40] sm:$0xff]
    %v62 = vld [vmem:[#allocation6 + $0x48] sm:$0xff]
    %v63 = vld [vmem:[#allocation6 + $0x50] sm:$0xff]
    %v64 = vld [vmem:[#allocation6 + $0x58] sm:$0xff]
    %v65 = vld [vmem:[#allocation6 + $0x60] sm:$0xff]
    %v66 = vld [vmem:[#allocation6 + $0x68] sm:$0xff]
    %v67 = vld [vmem:[#allocation6 + $0x70] sm:$0xff]
    %v68 = vld [vmem:[#allocation6 + $0x78] sm:$0xff]
    %69 = vmatprep.subr.mxu0 0.0
    %70 = vmatpush1.msra.mxu0 %v68
    %71 = vmatprep.subr.mxu0 0.0
    %72 = vmatpush1.msra.mxu0 %v67
    %73 = vmatprep.subr.mxu0 0.0
    %74 = vmatpush1.msra.mxu0 %v66
    %75 = vmatprep.subr.mxu0 0.0
    %76 = vmatpush1.msra.mxu0 %v65
    %77 = vmatprep.subr.mxu0 0.0
    %78 = vmatpush1.msra.mxu0 %v64
    %79 = vmatprep.subr.mxu0 0.0
    %80 = vmatpush1.msra.mxu0 %v63
    %81 = vmatprep.subr.mxu0 0.0
    %82 = vmatpush1.msra.mxu0 %v62
    %83 = vmatprep.subr.mxu0 0.0
    %84 = vmatpush1.msra.mxu0 %v61
    %85 = vmatprep.subr.mxu0 0.0
    %86 = vmatpush1.msra.mxu0 %v60
    %87 = vmatprep.subr.mxu0 0.0
    %88 = vmatpush1.msra.mxu0 %v59
    %89 = vmatprep.subr.mxu0 0.0
    %90 = vmatpush1.msra.mxu0 %v58
    %91 = vmatprep.subr.mxu0 0.0
    %92 = vmatpush1.msra.mxu0 %v57
    %93 = vmatprep.subr.mxu0 0.0
    %94 = vmatpush1.msra.mxu0 %v56
    %95 = vmatprep.subr.mxu0 0.0
    %96 = vmatpush1.msra.mxu0 %v55
    %97 = vmatprep.subr.mxu0 0.0
    %98 = vmatpush1.msra.mxu0 %v54
    %99 = vmatprep.subr.mxu0 0.0
    %100 = vmatpush1.msra.mxu0 %v53
    %101 = vmatprep.subr.mxu0 0.0
    %102 = vmatpush2.msra.mxu0 0.0
    %103 = vmatprep.subr.mxu0 0.0
    %104 = vmatpush2.msra.mxu0 0.0
    %105 = vmatprep.subr.mxu0 0.0
    %106 = vmatpush2.msra.mxu0 0.0
    %107 = vmatprep.subr.mxu0 0.0
    %108 = vmatpush2.msra.mxu0 0.0
    %109 = vmatprep.subr.mxu0 0.0
    %110 = vmatpush2.msra.mxu0 0.0
    %111 = vmatprep.subr.mxu0 0.0
    %112 = vmatpush2.msra.mxu0 0.0
    %113 = vmatprep.subr.mxu0 0.0
    %114 = vmatpush2.msra.mxu0 0.0
    %115 = vmatprep.subr.mxu0 0.0
    %116 = vmatpush2.msra.mxu0 0.0
    %117 = vmatprep.subr.mxu0 0.0
    %118 = vmatpush2.msra.mxu0 0.0
    %119 = vmatprep.subr.mxu0 0.0
    %120 = vmatpush2.msra.mxu0 0.0
    %121 = vmatprep.subr.mxu0 0.0
    %122 = vmatpush2.msra.mxu0 0.0
    %123 = vmatprep.subr.mxu0 0.0
    %124 = vmatpush2.msra.mxu0 0.0
    %125 = vmatprep.subr.mxu0 0.0
    %126 = vmatpush2.msra.mxu0 0.0
    %127 = vmatprep.subr.mxu0 0.0
    %128 = vmatpush2.msra.mxu0 0.0
    %129 = vmatprep.subr.mxu0 0.0
    %130 = vmatpush2.msra.mxu0 0.0
    %131 = vmatprep.subr.mxu0 0.0
    %132 = vmatpush2.msra.mxu0 0.0
    %133 = vmatprep.mubr.f32.mxu0 0.0
    %134 = vmatmul.mubr.f32.gmra.mxu0 %v49
    %v135 = vpop.f32.mrf.mxu0
    %v136 = vadd.f32 0.0, %v135
    %v137 = vpop.f32.mrf.mxu0
    %138 = vdwg.mxu0
    %v139 = vadd.f32 %v52, %v136
    %v140 = vmax.f32 %v139, 0.0
    %s141 = scalar_lea.vmem [#allocation6], 128
    %v142 = vld [vmem:[%s141] sm:$0xff]
    %v143 = vld [vmem:[%s141 + $0x8] sm:$0xff]
    %v144 = vld [vmem:[%s141 + $0x10] sm:$0xff]
    %v145 = vld [vmem:[%s141 + $0x18] sm:$0xff]
    %v146 = vld [vmem:[%s141 + $0x20] sm:$0xff]
    %v147 = vld [vmem:[%s141 + $0x28] sm:$0xff]
    %v148 = vld [vmem:[%s141 + $0x30] sm:$0xff]
    %v149 = vld [vmem:[%s141 + $0x38] sm:$0xff]
    %v150 = vld [vmem:[%s141 + $0x40] sm:$0xff]
    %v151 = vld [vmem:[%s141 + $0x48] sm:$0xff]
    %v152 = vld [vmem:[%s141 + $0x50] sm:$0xff]
    %v153 = vld [vmem:[%s141 + $0x58] sm:$0xff]
    %v154 = vld [vmem:[%s141 + $0x60] sm:$0xff]
    %v155 = vld [vmem:[%s141 + $0x68] sm:$0xff]
    %v156 = vld [vmem:[%s141 + $0x70] sm:$0xff]
    %v157 = vld [vmem:[%s141 + $0x78] sm:$0xff]
    %v158 = vadd.f32 %v140, %v51
    %159 = vmatprep.subr.mxu0 0.0
    %160 = vmatpush1.msra.mxu0 %v157
    %161 = vmatprep.subr.mxu0 0.0
    %162 = vmatpush1.msra.mxu0 %v156
    %163 = vmatprep.subr.mxu0 0.0
    %164 = vmatpush1.msra.mxu0 %v155
    %165 = vmatprep.subr.mxu0 0.0
    %166 = vmatpush1.msra.mxu0 %v154
    %167 = vmatprep.subr.mxu0 0.0
    %168 = vmatpush1.msra.mxu0 %v153
    %169 = vmatprep.subr.mxu0 0.0
    %170 = vmatpush1.msra.mxu0 %v152
    %171 = vmatprep.subr.mxu0 0.0
    %172 = vmatpush1.msra.mxu0 %v151
    %173 = vmatprep.subr.mxu0 0.0
    %174 = vmatpush1.msra.mxu0 %v150
    %175 = vmatprep.subr.mxu0 0.0
    %176 = vmatpush1.msra.mxu0 %v149
    %177 = vmatprep.subr.mxu0 0.0
    %178 = vmatpush1.msra.mxu0 %v148
    %179 = vmatprep.subr.mxu0 0.0
    %180 = vmatpush1.msra.mxu0 %v147
    %181 = vmatprep.subr.mxu0 0.0
    %182 = vmatpush1.msra.mxu0 %v146
    %183 = vmatprep.subr.mxu0 0.0
    %184 = vmatpush1.msra.mxu0 %v145
    %185 = vmatprep.subr.mxu0 0.0
    %186 = vmatpush1.msra.mxu0 %v144
    %187 = vmatprep.subr.mxu0 0.0
    %188 = vmatpush1.msra.mxu0 %v143
    %189 = vmatprep.subr.mxu0 0.0
    %190 = vmatpush1.msra.mxu0 %v142
    %191 = vmatprep.subr.mxu0 0.0
    %192 = vmatpush2.msra.mxu0 0.0
    %193 = vmatprep.subr.mxu0 0.0
    %194 = vmatpush2.msra.mxu0 0.0
    %195 = vmatprep.subr.mxu0 0.0
    %196 = vmatpush2.msra.mxu0 0.0
    %197 = vmatprep.subr.mxu0 0.0
    %198 = vmatpush2.msra.mxu0 0.0
    %199 = vmatprep.subr.mxu0 0.0
    %200 = vmatpush2.msra.mxu0 0.0
    %201 = vmatprep.subr.mxu0 0.0
    %202 = vmatpush2.msra.mxu0 0.0
    %203 = vmatprep.subr.mxu0 0.0
    %204 = vmatpush2.msra.mxu0 0.0
    %205 = vmatprep.subr.mxu0 0.0
    %206 = vmatpush2.msra.mxu0 0.0
    %207 = vmatprep.subr.mxu0 0.0
    %208 = vmatpush2.msra.mxu0 0.0
    %209 = vmatprep.subr.mxu0 0.0
    %210 = vmatpush2.msra.mxu0 0.0
    %211 = vmatprep.subr.mxu0 0.0
    %212 = vmatpush2.msra.mxu0 0.0
    %213 = vmatprep.subr.mxu0 0.0
    %214 = vmatpush2.msra.mxu0 0.0
    %215 = vmatprep.subr.mxu0 0.0
    %216 = vmatpush2.msra.mxu0 0.0
    %217 = vmatprep.subr.mxu0 0.0
    %218 = vmatpush2.msra.mxu0 0.0
    %219 = vmatprep.subr.mxu0 0.0
    %220 = vmatpush2.msra.mxu0 0.0
    %221 = vmatprep.subr.mxu0 0.0
    %222 = vmatpush2.msra.mxu0 0.0
    %223 = vmatprep.mubr.f32.mxu0 0.0
    %224 = vmatmul.mubr.f32.gmra.mxu0 %v158
    %v225 = vpop.f32.mrf.mxu0
    %v226 = vadd.f32 0.0, %v225
    %v227 = vpop.f32.mrf.mxu0
    %228 = vdwg.mxu0
    %v229 = vmax.f32 %v226, 0.0
    %230 = vst [vmem:[#allocation8] sm:$0xff] %v229
    %s231 = scalar_lea.vmem [#allocation3], 8
    %v232 = vld [vmem:[%s231] sm:$0xff]
    %v233 = vld [vmem:[#allocation6] sm:$0xff]
    %v234 = vld [vmem:[#allocation6 + $0x8] sm:$0xff]
    %v235 = vld [vmem:[#allocation6 + $0x10] sm:$0xff]
    %v236 = vld [vmem:[#allocation6 + $0x18] sm:$0xff]
    %v237 = vld [vmem:[#allocation6 + $0x20] sm:$0xff]
    %v238 = vld [vmem:[#allocation6 + $0x28] sm:$0xff]
    %v239 = vld [vmem:[#allocation6 + $0x30] sm:$0xff]
    %v240 = vld [vmem:[#allocation6 + $0x38] sm:$0xff]
    %v241 = vld [vmem:[#allocation6 + $0x40] sm:$0xff]
    %v242 = vld [vmem:[#allocation6 + $0x48] sm:$0xff]
    %v243 = vld [vmem:[#allocation6 + $0x50] sm:$0xff]
    %v244 = vld [vmem:[#allocation6 + $0x58] sm:$0xff]
    %v245 = vld [vmem:[#allocation6 + $0x60] sm:$0xff]
    %v246 = vld [vmem:[#allocation6 + $0x68] sm:$0xff]
    %v247 = vld [vmem:[#allocation6 + $0x70] sm:$0xff]
    %v248 = vld [vmem:[#allocation6 + $0x78] sm:$0xff]
    %249 = vmatprep.subr.mxu0 0.0
    %250 = vmatpush1.msra.mxu0 %v248
    %251 = vmatprep.subr.mxu0 0.0
    %252 = vmatpush1.msra.mxu0 %v247
    %253 = vmatprep.subr.mxu0 0.0
    %254 = vmatpush1.msra.mxu0 %v246
    %255 = vmatprep.subr.mxu0 0.0
    %256 = vmatpush1.msra.mxu0 %v245
    %257 = vmatprep.subr.mxu0 0.0
    %258 = vmatpush1.msra.mxu0 %v244
    %259 = vmatprep.subr.mxu0 0.0
    %260 = vmatpush1.msra.mxu0 %v243
    %261 = vmatprep.subr.mxu0 0.0
    %262 = vmatpush1.msra.mxu0 %v242
    %263 = vmatprep.subr.mxu0 0.0
    %264 = vmatpush1.msra.mxu0 %v241
    %265 = vmatprep.subr.mxu0 0.0
    %266 = vmatpush1.msra.mxu0 %v240
    %267 = vmatprep.subr.mxu0 0.0
    %268 = vmatpush1.msra.mxu0 %v239
    %269 = vmatprep.subr.mxu0 0.0
    %270 = vmatpush1.msra.mxu0 %v238
    %271 = vmatprep.subr.mxu0 0.0
    %272 = vmatpush1.msra.mxu0 %v237
    %273 = vmatprep.subr.mxu0 0.0
    %274 = vmatpush1.msra.mxu0 %v236
    %275 = vmatprep.subr.mxu0 0.0
    %276 = vmatpush1.msra.mxu0 %v235
    %277 = vmatprep.subr.mxu0 0.0
    %278 = vmatpush1.msra.mxu0 %v234
    %279 = vmatprep.subr.mxu0 0.0
    %280 = vmatpush1.msra.mxu0 %v233
    %281 = vmatprep.subr.mxu0 0.0
    %282 = vmatpush2.msra.mxu0 0.0
    %283 = vmatprep.subr.mxu0 0.0
    %284 = vmatpush2.msra.mxu0 0.0
    %285 = vmatprep.subr.mxu0 0.0
    %286 = vmatpush2.msra.mxu0 0.0
    %287 = vmatprep.subr.mxu0 0.0
    %288 = vmatpush2.msra.mxu0 0.0
    %289 = vmatprep.subr.mxu0 0.0
    %290 = vmatpush2.msra.mxu0 0.0
    %291 = vmatprep.subr.mxu0 0.0
    %292 = vmatpush2.msra.mxu0 0.0
    %293 = vmatprep.subr.mxu0 0.0
    %294 = vmatpush2.msra.mxu0 0.0
    %295 = vmatprep.subr.mxu0 0.0
    %296 = vmatpush2.msra.mxu0 0.0
    %297 = vmatprep.subr.mxu0 0.0
    %298 = vmatpush2.msra.mxu0 0.0
    %299 = vmatprep.subr.mxu0 0.0
    %300 = vmatpush2.msra.mxu0 0.0
    %301 = vmatprep.subr.mxu0 0.0
    %302 = vmatpush2.msra.mxu0 0.0
    %303 = vmatprep.subr.mxu0 0.0
    %304 = vmatpush2.msra.mxu0 0.0
    %305 = vmatprep.subr.mxu0 0.0
    %306 = vmatpush2.msra.mxu0 0.0
    %307 = vmatprep.subr.mxu0 0.0
    %308 = vmatpush2.msra.mxu0 0.0
    %309 = vmatprep.subr.mxu0 0.0
    %310 = vmatpush2.msra.mxu0 0.0
    %311 = vmatprep.subr.mxu0 0.0
    %312 = vmatpush2.msra.mxu0 0.0
    %313 = vmatprep.mubr.f32.mxu0 0.0
    %314 = vmatmul.mubr.f32.gmra.mxu0 %v140
    %v315 = vpop.f32.mrf.mxu0
    %v316 = vadd.f32 0.0, %v315
    %v317 = vpop.f32.mrf.mxu0
    %318 = vdwg.mxu0
    %v319 = vadd.f32 %v232, %v316
    %v320 = vmax.f32 %v319, 0.0
    %v321 = vld [vmem:[%s141] sm:$0xff]
    %v322 = vld [vmem:[%s141 + $0x8] sm:$0xff]
    %v323 = vld [vmem:[%s141 + $0x10] sm:$0xff]
    %v324 = vld [vmem:[%s141 + $0x18] sm:$0xff]
    %v325 = vld [vmem:[%s141 + $0x20] sm:$0xff]
    %v326 = vld [vmem:[%s141 + $0x28] sm:$0xff]
    %v327 = vld [vmem:[%s141 + $0x30] sm:$0xff]
    %v328 = vld [vmem:[%s141 + $0x38] sm:$0xff]
    %v329 = vld [vmem:[%s141 + $0x40] sm:$0xff]
    %v330 = vld [vmem:[%s141 + $0x48] sm:$0xff]
    %v331 = vld [vmem:[%s141 + $0x50] sm:$0xff]
    %v332 = vld [vmem:[%s141 + $0x58] sm:$0xff]
    %v333 = vld [vmem:[%s141 + $0x60] sm:$0xff]
    %v334 = vld [vmem:[%s141 + $0x68] sm:$0xff]
    %v335 = vld [vmem:[%s141 + $0x70] sm:$0xff]
    %v336 = vld [vmem:[%s141 + $0x78] sm:$0xff]
    %v337 = vadd.f32 %v320, %v229
    %338 = vmatprep.subr.mxu0 0.0
    %339 = vmatpush1.msra.mxu0 %v336
    %340 = vmatprep.subr.mxu0 0.0
    %341 = vmatpush1.msra.mxu0 %v335
    %342 = vmatprep.subr.mxu0 0.0
    %343 = vmatpush1.msra.mxu0 %v334
    %344 = vmatprep.subr.mxu0 0.0
    %345 = vmatpush1.msra.mxu0 %v333
    %346 = vmatprep.subr.mxu0 0.0
    %347 = vmatpush1.msra.mxu0 %v332
    %348 = vmatprep.subr.mxu0 0.0
    %349 = vmatpush1.msra.mxu0 %v331
    %350 = vmatprep.subr.mxu0 0.0
    %351 = vmatpush1.msra.mxu0 %v330
    %352 = vmatprep.subr.mxu0 0.0
    %353 = vmatpush1.msra.mxu0 %v329
    %354 = vmatprep.subr.mxu0 0.0
    %355 = vmatpush1.msra.mxu0 %v328
    %356 = vmatprep.subr.mxu0 0.0
    %357 = vmatpush1.msra.mxu0 %v327
    %358 = vmatprep.subr.mxu0 0.0
    %359 = vmatpush1.msra.mxu0 %v326
    %360 = vmatprep.subr.mxu0 0.0
    %361 = vmatpush1.msra.mxu0 %v325
    %362 = vmatprep.subr.mxu0 0.0
    %363 = vmatpush1.msra.mxu0 %v324
    %364 = vmatprep.subr.mxu0 0.0
    %365 = vmatpush1.msra.mxu0 %v323
    %366 = vmatprep.subr.mxu0 0.0
    %367 = vmatpush1.msra.mxu0 %v322
    %368 = vmatprep.subr.mxu0 0.0
    %369 = vmatpush1.msra.mxu0 %v321
    %370 = vmatprep.subr.mxu0 0.0
    %371 = vmatpush2.msra.mxu0 0.0
    %372 = vmatprep.subr.mxu0 0.0
    %373 = vmatpush2.msra.mxu0 0.0
    %374 = vmatprep.subr.mxu0 0.0
    %375 = vmatpush2.msra.mxu0 0.0
    %376 = vmatprep.subr.mxu0 0.0
    %377 = vmatpush2.msra.mxu0 0.0
    %378 = vmatprep.subr.mxu0 0.0
    %379 = vmatpush2.msra.mxu0 0.0
    %380 = vmatprep.subr.mxu0 0.0
    %381 = vmatpush2.msra.mxu0 0.0
    %382 = vmatprep.subr.mxu0 0.0
    %383 = vmatpush2.msra.mxu0 0.0
    %384 = vmatprep.subr.mxu0 0.0
    %385 = vmatpush2.msra.mxu0 0.0
    %386 = vmatprep.subr.mxu0 0.0
    %387 = vmatpush2.msra.mxu0 0.0
    %388 = vmatprep.subr.mxu0 0.0
    %389 = vmatpush2.msra.mxu0 0.0
    %390 = vmatprep.subr.mxu0 0.0
    %391 = vmatpush2.msra.mxu0 0.0
    %392 = vmatprep.subr.mxu0 0.0
    %393 = vmatpush2.msra.mxu0 0.0
    %394 = vmatprep.subr.mxu0 0.0
    %395 = vmatpush2.msra.mxu0 0.0
    %396 = vmatprep.subr.mxu0 0.0
    %397 = vmatpush2.msra.mxu0 0.0
    %398 = vmatprep.subr.mxu0 0.0
    %399 = vmatpush2.msra.mxu0 0.0
    %400 = vmatprep.subr.mxu0 0.0
    %401 = vmatpush2.msra.mxu0 0.0
    %402 = vmatprep.mubr.f32.mxu0 0.0
    %403 = vmatmul.mubr.f32.gmra.mxu0 %v337
    %v404 = vpop.f32.mrf.mxu0
    %v405 = vadd.f32 0.0, %v404
    %v406 = vpop.f32.mrf.mxu0
    %407 = vdwg.mxu0
    %v408 = vmax.f32 %v405, 0.0
    %s409 = scalar_lea.vmem [#allocation8], 8
    %410 = vst [vmem:[%s409] sm:$0xff] %v408
    %s411 = scalar_lea.vmem [#allocation3], 16
    %v412 = vld [vmem:[%s411] sm:$0xff]
    %v413 = vld [vmem:[#allocation6] sm:$0xff]
    %v414 = vld [vmem:[#allocation6 + $0x8] sm:$0xff]
    %v415 = vld [vmem:[#allocation6 + $0x10] sm:$0xff]
    %v416 = vld [vmem:[#allocation6 + $0x18] sm:$0xff]
    %v417 = vld [vmem:[#allocation6 + $0x20] sm:$0xff]
    %v418 = vld [vmem:[#allocation6 + $0x28] sm:$0xff]
    %v419 = vld [vmem:[#allocation6 + $0x30] sm:$0xff]
    %v420 = vld [vmem:[#allocation6 + $0x38] sm:$0xff]
    %v421 = vld [vmem:[#allocation6 + $0x40] sm:$0xff]
    %v422 = vld [vmem:[#allocation6 + $0x48] sm:$0xff]
    %v423 = vld [vmem:[#allocation6 + $0x50] sm:$0xff]
    %v424 = vld [vmem:[#allocation6 + $0x58] sm:$0xff]
    %v425 = vld [vmem:[#allocation6 + $0x60] sm:$0xff]
    %v426 = vld [vmem:[#allocation6 + $0x68] sm:$0xff]
    %v427 = vld [vmem:[#allocation6 + $0x70] sm:$0xff]
    %v428 = vld [vmem:[#allocation6 + $0x78] sm:$0xff]
    %429 = vmatprep.subr.mxu0 0.0
    %430 = vmatpush1.msra.mxu0 %v428
    %431 = vmatprep.subr.mxu0 0.0
    %432 = vmatpush1.msra.mxu0 %v427
    %433 = vmatprep.subr.mxu0 0.0
    %434 = vmatpush1.msra.mxu0 %v426
    %435 = vmatprep.subr.mxu0 0.0
    %436 = vmatpush1.msra.mxu0 %v425
    %437 = vmatprep.subr.mxu0 0.0
    %438 = vmatpush1.msra.mxu0 %v424
    %439 = vmatprep.subr.mxu0 0.0
    %440 = vmatpush1.msra.mxu0 %v423
    %441 = vmatprep.subr.mxu0 0.0
    %442 = vmatpush1.msra.mxu0 %v422
    %443 = vmatprep.subr.mxu0 0.0
    %444 = vmatpush1.msra.mxu0 %v421
    %445 = vmatprep.subr.mxu0 0.0
    %446 = vmatpush1.msra.mxu0 %v420
    %447 = vmatprep.subr.mxu0 0.0
    %448 = vmatpush1.msra.mxu0 %v419
    %449 = vmatprep.subr.mxu0 0.0
    %450 = vmatpush1.msra.mxu0 %v418
    %451 = vmatprep.subr.mxu0 0.0
    %452 = vmatpush1.msra.mxu0 %v417
    %453 = vmatprep.subr.mxu0 0.0
    %454 = vmatpush1.msra.mxu0 %v416
    %455 = vmatprep.subr.mxu0 0.0
    %456 = vmatpush1.msra.mxu0 %v415
    %457 = vmatprep.subr.mxu0 0.0
    %458 = vmatpush1.msra.mxu0 %v414
    %459 = vmatprep.subr.mxu0 0.0
    %460 = vmatpush1.msra.mxu0 %v413
    %461 = vmatprep.subr.mxu0 0.0
    %462 = vmatpush2.msra.mxu0 0.0
    %463 = vmatprep.subr.mxu0 0.0
    %464 = vmatpush2.msra.mxu0 0.0
    %465 = vmatprep.subr.mxu0 0.0
    %466 = vmatpush2.msra.mxu0 0.0
    %467 = vmatprep.subr.mxu0 0.0
    %468 = vmatpush2.msra.mxu0 0.0
    %469 = vmatprep.subr.mxu0 0.0
    %470 = vmatpush2.msra.mxu0 0.0
    %471 = vmatprep.subr.mxu0 0.0
    %472 = vmatpush2.msra.mxu0 0.0
    %473 = vmatprep.subr.mxu0 0.0
    %474 = vmatpush2.msra.mxu0 0.0
    %475 = vmatprep.subr.mxu0 0.0
    %476 = vmatpush2.msra.mxu0 0.0
    %477 = vmatprep.subr.mxu0 0.0
    %478 = vmatpush2.msra.mxu0 0.0
    %479 = vmatprep.subr.mxu0 0.0
    %480 = vmatpush2.msra.mxu0 0.0
    %481 = vmatprep.subr.mxu0 0.0
    %482 = vmatpush2.msra.mxu0 0.0
    %483 = vmatprep.subr.mxu0 0.0
    %484 = vmatpush2.msra.mxu0 0.0
    %485 = vmatprep.subr.mxu0 0.0
    %486 = vmatpush2.msra.mxu0 0.0
    %487 = vmatprep.subr.mxu0 0.0
    %488 = vmatpush2.msra.mxu0 0.0
    %489 = vmatprep.subr.mxu0 0.0
    %490 = vmatpush2.msra.mxu0 0.0
    %491 = vmatprep.subr.mxu0 0.0
    %492 = vmatpush2.msra.mxu0 0.0
    %493 = vmatprep.mubr.f32.mxu0 0.0
    %494 = vmatmul.mubr.f32.gmra.mxu0 %v320
    %v495 = vpop.f32.mrf.mxu0
    %v496 = vadd.f32 0.0, %v495
    %v497 = vpop.f32.mrf.mxu0
    %498 = vdwg.mxu0
    %v499 = vadd.f32 %v412, %v496
    %v500 = vmax.f32 %v499, 0.0
    %v501 = vld [vmem:[%s141] sm:$0xff]
    %v502 = vld [vmem:[%s141 + $0x8] sm:$0xff]
    %v503 = vld [vmem:[%s141 + $0x10] sm:$0xff]
    %v504 = vld [vmem:[%s141 + $0x18] sm:$0xff]
    %v505 = vld [vmem:[%s141 + $0x20] sm:$0xff]
    %v506 = vld [vmem:[%s141 + $0x28] sm:$0xff]
    %v507 = vld [vmem:[%s141 + $0x30] sm:$0xff]
    %v508 = vld [vmem:[%s141 + $0x38] sm:$0xff]
    %v509 = vld [vmem:[%s141 + $0x40] sm:$0xff]
    %v510 = vld [vmem:[%s141 + $0x48] sm:$0xff]
    %v511 = vld [vmem:[%s141 + $0x50] sm:$0xff]
    %v512 = vld [vmem:[%s141 + $0x58] sm:$0xff]
    %v513 = vld [vmem:[%s141 + $0x60] sm:$0xff]
    %v514 = vld [vmem:[%s141 + $0x68] sm:$0xff]
    %v515 = vld [vmem:[%s141 + $0x70] sm:$0xff]
    %v516 = vld [vmem:[%s141 + $0x78] sm:$0xff]
    %v517 = vadd.f32 %v500, %v408
    %518 = vmatprep.subr.mxu0 0.0
    %519 = vmatpush1.msra.mxu0 %v516
    %520 = vmatprep.subr.mxu0 0.0
    %521 = vmatpush1.msra.mxu0 %v515
    %522 = vmatprep.subr.mxu0 0.0
    %523 = vmatpush1.msra.mxu0 %v514
    %524 = vmatprep.subr.mxu0 0.0
    %525 = vmatpush1.msra.mxu0 %v513
    %526 = vmatprep.subr.mxu0 0.0
    %527 = vmatpush1.msra.mxu0 %v512
    %528 = vmatprep.subr.mxu0 0.0
    %529 = vmatpush1.msra.mxu0 %v511
    %530 = vmatprep.subr.mxu0 0.0
    %531 = vmatpush1.msra.mxu0 %v510
    %532 = vmatprep.subr.mxu0 0.0
    %533 = vmatpush1.msra.mxu0 %v509
    %534 = vmatprep.subr.mxu0 0.0
    %535 = vmatpush1.msra.mxu0 %v508
    %536 = vmatprep.subr.mxu0 0.0
    %537 = vmatpush1.msra.mxu0 %v507
    %538 = vmatprep.subr.mxu0 0.0
    %539 = vmatpush1.msra.mxu0 %v506
    %540 = vmatprep.subr.mxu0 0.0
    %541 = vmatpush1.msra.mxu0 %v505
    %542 = vmatprep.subr.mxu0 0.0
    %543 = vmatpush1.msra.mxu0 %v504
    %544 = vmatprep.subr.mxu0 0.0
    %545 = vmatpush1.msra.mxu0 %v503
    %546 = vmatprep.subr.mxu0 0.0
    %547 = vmatpush1.msra.mxu0 %v502
    %548 = vmatprep.subr.mxu0 0.0
    %549 = vmatpush1.msra.mxu0 %v501
    %550 = vmatprep.subr.mxu0 0.0
    %551 = vmatpush2.msra.mxu0 0.0
    %552 = vmatprep.subr.mxu0 0.0
    %553 = vmatpush2.msra.mxu0 0.0
    %554 = vmatprep.subr.mxu0 0.0
    %555 = vmatpush2.msra.mxu0 0.0
    %556 = vmatprep.subr.mxu0 0.0
    %557 = vmatpush2.msra.mxu0 0.0
    %558 = vmatprep.subr.mxu0 0.0
    %559 = vmatpush2.msra.mxu0 0.0
    %560 = vmatprep.subr.mxu0 0.0
    %561 = vmatpush2.msra.mxu0 0.0
    %562 = vmatprep.subr.mxu0 0.0
    %563 = vmatpush2.msra.mxu0 0.0
    %564 = vmatprep.subr.mxu0 0.0
    %565 = vmatpush2.msra.mxu0 0.0
    %566 = vmatprep.subr.mxu0 0.0
    %567 = vmatpush2.msra.mxu0 0.0
    %568 = vmatprep.subr.mxu0 0.0
    %569 = vmatpush2.msra.mxu0 0.0
    %570 = vmatprep.subr.mxu0 0.0
    %571 = vmatpush2.msra.mxu0 0.0
    %572 = vmatprep.subr.mxu0 0.0
    %573 = vmatpush2.msra.mxu0 0.0
    %574 = vmatprep.subr.mxu0 0.0
    %575 = vmatpush2.msra.mxu0 0.0
    %576 = vmatprep.subr.mxu0 0.0
    %577 = vmatpush2.msra.mxu0 0.0
    %578 = vmatprep.subr.mxu0 0.0
    %579 = vmatpush2.msra.mxu0 0.0
    %580 = vmatprep.subr.mxu0 0.0
    %581 = vmatpush2.msra.mxu0 0.0
    %582 = vmatprep.mubr.f32.mxu0 0.0
    %583 = vmatmul.mubr.f32.gmra.mxu0 %v517
    %v584 = vpop.f32.mrf.mxu0
    %v585 = vadd.f32 0.0, %v584
    %v586 = vpop.f32.mrf.mxu0
    %587 = vdwg.mxu0
    %v588 = vmax.f32 %v585, 0.0
    %s589 = scalar_lea.vmem [#allocation8], 16
    %590 = vst [vmem:[%s589] sm:$0xff] %v588
    %s591 = scalar_lea.vmem [#allocation3], 24
    %v592 = vld [vmem:[%s591] sm:$0xff]
    %v593 = vld [vmem:[#allocation6] sm:$0xff]
    %v594 = vld [vmem:[#allocation6 + $0x8] sm:$0xff]
    %v595 = vld [vmem:[#allocation6 + $0x10] sm:$0xff]
    %v596 = vld [vmem:[#allocation6 + $0x18] sm:$0xff]
    %v597 = vld [vmem:[#allocation6 + $0x20] sm:$0xff]
    %v598 = vld [vmem:[#allocation6 + $0x28] sm:$0xff]
    %v599 = vld [vmem:[#allocation6 + $0x30] sm:$0xff]
    %v600 = vld [vmem:[#allocation6 + $0x38] sm:$0xff]
    %v601 = vld [vmem:[#allocation6 + $0x40] sm:$0xff]
    %v602 = vld [vmem:[#allocation6 + $0x48] sm:$0xff]
    %v603 = vld [vmem:[#allocation6 + $0x50] sm:$0xff]
    %v604 = vld [vmem:[#allocation6 + $0x58] sm:$0xff]
    %v605 = vld [vmem:[#allocation6 + $0x60] sm:$0xff]
    %v606 = vld [vmem:[#allocation6 + $0x68] sm:$0xff]
    %v607 = vld [vmem:[#allocation6 + $0x70] sm:$0xff]
    %v608 = vld [vmem:[#allocation6 + $0x78] sm:$0xff]
    %609 = vmatprep.subr.mxu0 0.0
    %610 = vmatpush1.msra.mxu0 %v608
    %611 = vmatprep.subr.mxu0 0.0
    %612 = vmatpush1.msra.mxu0 %v607
    %613 = vmatprep.subr.mxu0 0.0
    %614 = vmatpush1.msra.mxu0 %v606
    %615 = vmatprep.subr.mxu0 0.0
    %616 = vmatpush1.msra.mxu0 %v605
    %617 = vmatprep.subr.mxu0 0.0
    %618 = vmatpush1.msra.mxu0 %v604
    %619 = vmatprep.subr.mxu0 0.0
    %620 = vmatpush1.msra.mxu0 %v603
    %621 = vmatprep.subr.mxu0 0.0
    %622 = vmatpush1.msra.mxu0 %v602
    %623 = vmatprep.subr.mxu0 0.0
    %624 = vmatpush1.msra.mxu0 %v601
    %625 = vmatprep.subr.mxu0 0.0
    %626 = vmatpush1.msra.mxu0 %v600
    %627 = vmatprep.subr.mxu0 0.0
    %628 = vmatpush1.msra.mxu0 %v599
    %629 = vmatprep.subr.mxu0 0.0
    %630 = vmatpush1.msra.mxu0 %v598
    %631 = vmatprep.subr.mxu0 0.0
    %632 = vmatpush1.msra.mxu0 %v597
    %633 = vmatprep.subr.mxu0 0.0
    %634 = vmatpush1.msra.mxu0 %v596
    %635 = vmatprep.subr.mxu0 0.0
    %636 = vmatpush1.msra.mxu0 %v595
    %637 = vmatprep.subr.mxu0 0.0
    %638 = vmatpush1.msra.mxu0 %v594
    %639 = vmatprep.subr.mxu0 0.0
    %640 = vmatpush1.msra.mxu0 %v593
    %641 = vmatprep.subr.mxu0 0.0
    %642 = vmatpush2.msra.mxu0 0.0
    %643 = vmatprep.subr.mxu0 0.0
    %644 = vmatpush2.msra.mxu0 0.0
    %645 = vmatprep.subr.mxu0 0.0
    %646 = vmatpush2.msra.mxu0 0.0
    %647 = vmatprep.subr.mxu0 0.0
    %648 = vmatpush2.msra.mxu0 0.0
    %649 = vmatprep.subr.mxu0 0.0
    %650 = vmatpush2.msra.mxu0 0.0
    %651 = vmatprep.subr.mxu0 0.0
    %652 = vmatpush2.msra.mxu0 0.0
    %653 = vmatprep.subr.mxu0 0.0
    %654 = vmatpush2.msra.mxu0 0.0
    %655 = vmatprep.subr.mxu0 0.0
    %656 = vmatpush2.msra.mxu0 0.0
    %657 = vmatprep.subr.mxu0 0.0
    %658 = vmatpush2.msra.mxu0 0.0
    %659 = vmatprep.subr.mxu0 0.0
    %660 = vmatpush2.msra.mxu0 0.0
    %661 = vmatprep.subr.mxu0 0.0
    %662 = vmatpush2.msra.mxu0 0.0
    %663 = vmatprep.subr.mxu0 0.0
    %664 = vmatpush2.msra.mxu0 0.0
    %665 = vmatprep.subr.mxu0 0.0
    %666 = vmatpush2.msra.mxu0 0.0
    %667 = vmatprep.subr.mxu0 0.0
    %668 = vmatpush2.msra.mxu0 0.0
    %669 = vmatprep.subr.mxu0 0.0
    %670 = vmatpush2.msra.mxu0 0.0
    %671 = vmatprep.subr.mxu0 0.0
    %672 = vmatpush2.msra.mxu0 0.0
    %673 = vmatprep.mubr.f32.mxu0 0.0
    %674 = vmatmul.mubr.f32.gmra.mxu0 %v500
    %v675 = vpop.f32.mrf.mxu0
    %v676 = vadd.f32 0.0, %v675
    %v677 = vpop.f32.mrf.mxu0
    %678 = vdwg.mxu0
    %v679 = vadd.f32 %v592, %v676
    %v680 = vmax.f32 %v679, 0.0
    %v681 = vld [vmem:[%s141] sm:$0xff]
    %v682 = vld [vmem:[%s141 + $0x8] sm:$0xff]
    %v683 = vld [vmem:[%s141 + $0x10] sm:$0xff]
    %v684 = vld [vmem:[%s141 + $0x18] sm:$0xff]
    %v685 = vld [vmem:[%s141 + $0x20] sm:$0xff]
    %v686 = vld [vmem:[%s141 + $0x28] sm:$0xff]
    %v687 = vld [vmem:[%s141 + $0x30] sm:$0xff]
    %v688 = vld [vmem:[%s141 + $0x38] sm:$0xff]
    %v689 = vld [vmem:[%s141 + $0x40] sm:$0xff]
    %v690 = vld [vmem:[%s141 + $0x48] sm:$0xff]
    %v691 = vld [vmem:[%s141 + $0x50] sm:$0xff]
    %v692 = vld [vmem:[%s141 + $0x58] sm:$0xff]
    %v693 = vld [vmem:[%s141 + $0x60] sm:$0xff]
    %v694 = vld [vmem:[%s141 + $0x68] sm:$0xff]
    %v695 = vld [vmem:[%s141 + $0x70] sm:$0xff]
    %v696 = vld [vmem:[%s141 + $0x78] sm:$0xff]
    %v697 = vadd.f32 %v680, %v588
    %698 = vmatprep.subr.mxu0 0.0
    %699 = vmatpush1.msra.mxu0 %v696
    %700 = vmatprep.subr.mxu0 0.0
    %701 = vmatpush1.msra.mxu0 %v695
    %702 = vmatprep.subr.mxu0 0.0
    %703 = vmatpush1.msra.mxu0 %v694
    %704 = vmatprep.subr.mxu0 0.0
    %705 = vmatpush1.msra.mxu0 %v693
    %706 = vmatprep.subr.mxu0 0.0
    %707 = vmatpush1.msra.mxu0 %v692
    %708 = vmatprep.subr.mxu0 0.0
    %709 = vmatpush1.msra.mxu0 %v691
    %710 = vmatprep.subr.mxu0 0.0
    %711 = vmatpush1.msra.mxu0 %v690
    %712 = vmatprep.subr.mxu0 0.0
    %713 = vmatpush1.msra.mxu0 %v689
    %714 = vmatprep.subr.mxu0 0.0
    %715 = vmatpush1.msra.mxu0 %v688
    %716 = vmatprep.subr.mxu0 0.0
    %717 = vmatpush1.msra.mxu0 %v687
    %718 = vmatprep.subr.mxu0 0.0
    %719 = vmatpush1.msra.mxu0 %v686
    %720 = vmatprep.subr.mxu0 0.0
    %721 = vmatpush1.msra.mxu0 %v685
    %722 = vmatprep.subr.mxu0 0.0
    %723 = vmatpush1.msra.mxu0 %v684
    %724 = vmatprep.subr.mxu0 0.0
    %725 = vmatpush1.msra.mxu0 %v683
    %726 = vmatprep.subr.mxu0 0.0
    %727 = vmatpush1.msra.mxu0 %v682
    %728 = vmatprep.subr.mxu0 0.0
    %729 = vmatpush1.msra.mxu0 %v681
    %730 = vmatprep.subr.mxu0 0.0
    %731 = vmatpush2.msra.mxu0 0.0
    %732 = vmatprep.subr.mxu0 0.0
    %733 = vmatpush2.msra.mxu0 0.0
    %734 = vmatprep.subr.mxu0 0.0
    %735 = vmatpush2.msra.mxu0 0.0
    %736 = vmatprep.subr.mxu0 0.0
    %737 = vmatpush2.msra.mxu0 0.0
    %738 = vmatprep.subr.mxu0 0.0
    %739 = vmatpush2.msra.mxu0 0.0
    %740 = vmatprep.subr.mxu0 0.0
    %741 = vmatpush2.msra.mxu0 0.0
    %742 = vmatprep.subr.mxu0 0.0
    %743 = vmatpush2.msra.mxu0 0.0
    %744 = vmatprep.subr.mxu0 0.0
    %745 = vmatpush2.msra.mxu0 0.0
    %746 = vmatprep.subr.mxu0 0.0
    %747 = vmatpush2.msra.mxu0 0.0
    %748 = vmatprep.subr.mxu0 0.0
    %749 = vmatpush2.msra.mxu0 0.0
    %750 = vmatprep.subr.mxu0 0.0
    %751 = vmatpush2.msra.mxu0 0.0
    %752 = vmatprep.subr.mxu0 0.0
    %753 = vmatpush2.msra.mxu0 0.0
    %754 = vmatprep.subr.mxu0 0.0
    %755 = vmatpush2.msra.mxu0 0.0
    %756 = vmatprep.subr.mxu0 0.0
    %757 = vmatpush2.msra.mxu0 0.0
    %758 = vmatprep.subr.mxu0 0.0
    %759 = vmatpush2.msra.mxu0 0.0
    %760 = vmatprep.subr.mxu0 0.0
    %761 = vmatpush2.msra.mxu0 0.0
    %762 = vmatprep.mubr.f32.mxu0 0.0
    %763 = vmatmul.mubr.f32.gmra.mxu0 %v697
    %v764 = vpop.f32.mrf.mxu0
    %v765 = vadd.f32 0.0, %v764
    %v766 = vpop.f32.mrf.mxu0
    %767 = vdwg.mxu0
    %v768 = vmax.f32 %v765, 0.0
    %s769 = scalar_lea.vmem [#allocation8], 24
    %770 = vst [vmem:[%s769] sm:$0xff] %v768
    %s771 = scalar_lea.vmem [#allocation3], 32
    %v772 = vld [vmem:[%s771] sm:$0xff]
    %v773 = vld [vmem:[#allocation6] sm:$0xff]
    %v774 = vld [vmem:[#allocation6 + $0x8] sm:$0xff]
    %v775 = vld [vmem:[#allocation6 + $0x10] sm:$0xff]
    %v776 = vld [vmem:[#allocation6 + $0x18] sm:$0xff]
    %v777 = vld [vmem:[#allocation6 + $0x20] sm:$0xff]
    %v778 = vld [vmem:[#allocation6 + $0x28] sm:$0xff]
    %v779 = vld [vmem:[#allocation6 + $0x30] sm:$0xff]
    %v780 = vld [vmem:[#allocation6 + $0x38] sm:$0xff]
    %v781 = vld [vmem:[#allocation6 + $0x40] sm:$0xff]
    %v782 = vld [vmem:[#allocation6 + $0x48] sm:$0xff]
    %v783 = vld [vmem:[#allocation6 + $0x50] sm:$0xff]
    %v784 = vld [vmem:[#allocation6 + $0x58] sm:$0xff]
    %v785 = vld [vmem:[#allocation6 + $0x60] sm:$0xff]
    %v786 = vld [vmem:[#allocation6 + $0x68] sm:$0xff]
    %v787 = vld [vmem:[#allocation6 + $0x70] sm:$0xff]
    %v788 = vld [vmem:[#allocation6 + $0x78] sm:$0xff]
    %789 = vmatprep.subr.mxu0 0.0
    %790 = vmatpush1.msra.mxu0 %v788
    %791 = vmatprep.subr.mxu0 0.0
    %792 = vmatpush1.msra.mxu0 %v787
    %793 = vmatprep.subr.mxu0 0.0
    %794 = vmatpush1.msra.mxu0 %v786
    %795 = vmatprep.subr.mxu0 0.0
    %796 = vmatpush1.msra.mxu0 %v785
    %797 = vmatprep.subr.mxu0 0.0
    %798 = vmatpush1.msra.mxu0 %v784
    %799 = vmatprep.subr.mxu0 0.0
    %800 = vmatpush1.msra.mxu0 %v783
    %801 = vmatprep.subr.mxu0 0.0
    %802 = vmatpush1.msra.mxu0 %v782
    %803 = vmatprep.subr.mxu0 0.0
    %804 = vmatpush1.msra.mxu0 %v781
    %805 = vmatprep.subr.mxu0 0.0
    %806 = vmatpush1.msra.mxu0 %v780
    %807 = vmatprep.subr.mxu0 0.0
    %808 = vmatpush1.msra.mxu0 %v779
    %809 = vmatprep.subr.mxu0 0.0
    %810 = vmatpush1.msra.mxu0 %v778
    %811 = vmatprep.subr.mxu0 0.0
    %812 = vmatpush1.msra.mxu0 %v777
    %813 = vmatprep.subr.mxu0 0.0
    %814 = vmatpush1.msra.mxu0 %v776
    %815 = vmatprep.subr.mxu0 0.0
    %816 = vmatpush1.msra.mxu0 %v775
    %817 = vmatprep.subr.mxu0 0.0
    %818 = vmatpush1.msra.mxu0 %v774
    %819 = vmatprep.subr.mxu0 0.0
    %820 = vmatpush1.msra.mxu0 %v773
    %821 = vmatprep.subr.mxu0 0.0
    %822 = vmatpush2.msra.mxu0 0.0
    %823 = vmatprep.subr.mxu0 0.0
    %824 = vmatpush2.msra.mxu0 0.0
    %825 = vmatprep.subr.mxu0 0.0
    %826 = vmatpush2.msra.mxu0 0.0
    %827 = vmatprep.subr.mxu0 0.0
    %828 = vmatpush2.msra.mxu0 0.0
    %829 = vmatprep.subr.mxu0 0.0
    %830 = vmatpush2.msra.mxu0 0.0
    %831 = vmatprep.subr.mxu0 0.0
    %832 = vmatpush2.msra.mxu0 0.0
    %833 = vmatprep.subr.mxu0 0.0
    %834 = vmatpush2.msra.mxu0 0.0
    %835 = vmatprep.subr.mxu0 0.0
    %836 = vmatpush2.msra.mxu0 0.0
    %837 = vmatprep.subr.mxu0 0.0
    %838 = vmatpush2.msra.mxu0 0.0
    %839 = vmatprep.subr.mxu0 0.0
    %840 = vmatpush2.msra.mxu0 0.0
    %841 = vmatprep.subr.mxu0 0.0
    %842 = vmatpush2.msra.mxu0 0.0
    %843 = vmatprep.subr.mxu0 0.0
    %844 = vmatpush2.msra.mxu0 0.0
    %845 = vmatprep.subr.mxu0 0.0
    %846 = vmatpush2.msra.mxu0 0.0
    %847 = vmatprep.subr.mxu0 0.0
    %848 = vmatpush2.msra.mxu0 0.0
    %849 = vmatprep.subr.mxu0 0.0
    %850 = vmatpush2.msra.mxu0 0.0
    %851 = vmatprep.subr.mxu0 0.0
    %852 = vmatpush2.msra.mxu0 0.0
    %853 = vmatprep.mubr.f32.mxu0 0.0
    %854 = vmatmul.mubr.f32.gmra.mxu0 %v680
    %v855 = vpop.f32.mrf.mxu0
    %v856 = vadd.f32 0.0, %v855
    %v857 = vpop.f32.mrf.mxu0
    %858 = vdwg.mxu0
    %v859 = vadd.f32 %v772, %v856
    %v860 = vmax.f32 %v859, 0.0
    %v861 = vld [vmem:[%s141] sm:$0xff]
    %v862 = vld [vmem:[%s141 + $0x8] sm:$0xff]
    %v863 = vld [vmem:[%s141 + $0x10] sm:$0xff]
    %v864 = vld [vmem:[%s141 + $0x18] sm:$0xff]
    %v865 = vld [vmem:[%s141 + $0x20] sm:$0xff]
    %v866 = vld [vmem:[%s141 + $0x28] sm:$0xff]
    %v867 = vld [vmem:[%s141 + $0x30] sm:$0xff]
    %v868 = vld [vmem:[%s141 + $0x38] sm:$0xff]
    %v869 = vld [vmem:[%s141 + $0x40] sm:$0xff]
    %v870 = vld [vmem:[%s141 + $0x48] sm:$0xff]
    %v871 = vld [vmem:[%s141 + $0x50] sm:$0xff]
    %v872 = vld [vmem:[%s141 + $0x58] sm:$0xff]
    %v873 = vld [vmem:[%s141 + $0x60] sm:$0xff]
    %v874 = vld [vmem:[%s141 + $0x68] sm:$0xff]
    %v875 = vld [vmem:[%s141 + $0x70] sm:$0xff]
    %v876 = vld [vmem:[%s141 + $0x78] sm:$0xff]
    %v877 = vadd.f32 %v860, %v768
    %878 = vmatprep.subr.mxu0 0.0
    %879 = vmatpush1.msra.mxu0 %v876
    %880 = vmatprep.subr.mxu0 0.0
    %881 = vmatpush1.msra.mxu0 %v875
    %882 = vmatprep.subr.mxu0 0.0
    %883 = vmatpush1.msra.mxu0 %v874
    %884 = vmatprep.subr.mxu0 0.0
    %885 = vmatpush1.msra.mxu0 %v873
    %886 = vmatprep.subr.mxu0 0.0
    %887 = vmatpush1.msra.mxu0 %v872
    %888 = vmatprep.subr.mxu0 0.0
    %889 = vmatpush1.msra.mxu0 %v871
    %890 = vmatprep.subr.mxu0 0.0
    %891 = vmatpush1.msra.mxu0 %v870
    %892 = vmatprep.subr.mxu0 0.0
    %893 = vmatpush1.msra.mxu0 %v869
    %894 = vmatprep.subr.mxu0 0.0
    %895 = vmatpush1.msra.mxu0 %v868
    %896 = vmatprep.subr.mxu0 0.0
    %897 = vmatpush1.msra.mxu0 %v867
    %898 = vmatprep.subr.mxu0 0.0
    %899 = vmatpush1.msra.mxu0 %v866
    %900 = vmatprep.subr.mxu0 0.0
    %901 = vmatpush1.msra.mxu0 %v865
    %902 = vmatprep.subr.mxu0 0.0
    %903 = vmatpush1.msra.mxu0 %v864
    %904 = vmatprep.subr.mxu0 0.0
    %905 = vmatpush1.msra.mxu0 %v863
    %906 = vmatprep.subr.mxu0 0.0
    %907 = vmatpush1.msra.mxu0 %v862
    %908 = vmatprep.subr.mxu0 0.0
    %909 = vmatpush1.msra.mxu0 %v861
    %910 = vmatprep.subr.mxu0 0.0
    %911 = vmatpush2.msra.mxu0 0.0
    %912 = vmatprep.subr.mxu0 0.0
    %913 = vmatpush2.msra.mxu0 0.0
    %914 = vmatprep.subr.mxu0 0.0
    %915 = vmatpush2.msra.mxu0 0.0
    %916 = vmatprep.subr.mxu0 0.0
    %917 = vmatpush2.msra.mxu0 0.0
    %918 = vmatprep.subr.mxu0 0.0
    %919 = vmatpush2.msra.mxu0 0.0
    %920 = vmatprep.subr.mxu0 0.0
    %921 = vmatpush2.msra.mxu0 0.0
    %922 = vmatprep.subr.mxu0 0.0
    %923 = vmatpush2.msra.mxu0 0.0
    %924 = vmatprep.subr.mxu0 0.0
    %925 = vmatpush2.msra.mxu0 0.0
    %926 = vmatprep.subr.mxu0 0.0
    %927 = vmatpush2.msra.mxu0 0.0
    %928 = vmatprep.subr.mxu0 0.0
    %929 = vmatpush2.msra.mxu0 0.0
    %930 = vmatprep.subr.mxu0 0.0
    %931 = vmatpush2.msra.mxu0 0.0
    %932 = vmatprep.subr.mxu0 0.0
    %933 = vmatpush2.msra.mxu0 0.0
    %934 = vmatprep.subr.mxu0 0.0
    %935 = vmatpush2.msra.mxu0 0.0
    %936 = vmatprep.subr.mxu0 0.0
    %937 = vmatpush2.msra.mxu0 0.0
    %938 = vmatprep.subr.mxu0 0.0
    %939 = vmatpush2.msra.mxu0 0.0
    %940 = vmatprep.subr.mxu0 0.0
    %941 = vmatpush2.msra.mxu0 0.0
    %942 = vmatprep.mubr.f32.mxu0 0.0
    %943 = vmatmul.mubr.f32.gmra.mxu0 %v877
    %v944 = vpop.f32.mrf.mxu0
    %v945 = vadd.f32 0.0, %v944
    %v946 = vpop.f32.mrf.mxu0
    %947 = vdwg.mxu0
    %v948 = vmax.f32 %v945, 0.0
    %s949 = scalar_lea.vmem [#allocation8], 32
    %950 = vst [vmem:[%s949] sm:$0xff] %v948
    %s951 = scalar_lea.vmem [#allocation3], 40
    %v952 = vld [vmem:[%s951] sm:$0xff]
    %v953 = vld [vmem:[#allocation6] sm:$0xff]
    %v954 = vld [vmem:[#allocation6 + $0x8] sm:$0xff]
    %v955 = vld [vmem:[#allocation6 + $0x10] sm:$0xff]
    %v956 = vld [vmem:[#allocation6 + $0x18] sm:$0xff]
    %v957 = vld [vmem:[#allocation6 + $0x20] sm:$0xff]
    %v958 = vld [vmem:[#allocation6 + $0x28] sm:$0xff]
    %v959 = vld [vmem:[#allocation6 + $0x30] sm:$0xff]
    %v960 = vld [vmem:[#allocation6 + $0x38] sm:$0xff]
    %v961 = vld [vmem:[#allocation6 + $0x40] sm:$0xff]
    %v962 = vld [vmem:[#allocation6 + $0x48] sm:$0xff]
    %v963 = vld [vmem:[#allocation6 + $0x50] sm:$0xff]
    %v964 = vld [vmem:[#allocation6 + $0x58] sm:$0xff]
    %v965 = vld [vmem:[#allocation6 + $0x60] sm:$0xff]
    %v966 = vld [vmem:[#allocation6 + $0x68] sm:$0xff]
    %v967 = vld [vmem:[#allocation6 + $0x70] sm:$0xff]
    %v968 = vld [vmem:[#allocation6 + $0x78] sm:$0xff]
    %969 = vmatprep.subr.mxu0 0.0
    %970 = vmatpush1.msra.mxu0 %v968
    %971 = vmatprep.subr.mxu0 0.0
    %972 = vmatpush1.msra.mxu0 %v967
    %973 = vmatprep.subr.mxu0 0.0
    %974 = vmatpush1.msra.mxu0 %v966
    %975 = vmatprep.subr.mxu0 0.0
    %976 = vmatpush1.msra.mxu0 %v965
    %977 = vmatprep.subr.mxu0 0.0
    %978 = vmatpush1.msra.mxu0 %v964
    %979 = vmatprep.subr.mxu0 0.0
    %980 = vmatpush1.msra.mxu0 %v963
    %981 = vmatprep.subr.mxu0 0.0
    %982 = vmatpush1.msra.mxu0 %v962
    %983 = vmatprep.subr.mxu0 0.0
    %984 = vmatpush1.msra.mxu0 %v961
    %985 = vmatprep.subr.mxu0 0.0
    %986 = vmatpush1.msra.mxu0 %v960
    %987 = vmatprep.subr.mxu0 0.0
    %988 = vmatpush1.msra.mxu0 %v959
    %989 = vmatprep.subr.mxu0 0.0
    %990 = vmatpush1.msra.mxu0 %v958
    %991 = vmatprep.subr.mxu0 0.0
    %992 = vmatpush1.msra.mxu0 %v957
    %993 = vmatprep.subr.mxu0 0.0
    %994 = vmatpush1.msra.mxu0 %v956
    %995 = vmatprep.subr.mxu0 0.0
    %996 = vmatpush1.msra.mxu0 %v955
    %997 = vmatprep.subr.mxu0 0.0
    %998 = vmatpush1.msra.mxu0 %v954
    %999 = vmatprep.subr.mxu0 0.0
    %1000 = vmatpush1.msra.mxu0 %v953
    %1001 = vmatprep.subr.mxu0 0.0
    %1002 = vmatpush2.msra.mxu0 0.0
    %1003 = vmatprep.subr.mxu0 0.0
    %1004 = vmatpush2.msra.mxu0 0.0
    %1005 = vmatprep.subr.mxu0 0.0
    %1006 = vmatpush2.msra.mxu0 0.0
    %1007 = vmatprep.subr.mxu0 0.0
    %1008 = vmatpush2.msra.mxu0 0.0
    %1009 = vmatprep.subr.mxu0 0.0
    %1010 = vmatpush2.msra.mxu0 0.0
    %1011 = vmatprep.subr.mxu0 0.0
    %1012 = vmatpush2.msra.mxu0 0.0
    %1013 = vmatprep.subr.mxu0 0.0
    %1014 = vmatpush2.msra.mxu0 0.0
    %1015 = vmatprep.subr.mxu0 0.0
    %1016 = vmatpush2.msra.mxu0 0.0
    %1017 = vmatprep.subr.mxu0 0.0
    %1018 = vmatpush2.msra.mxu0 0.0
    %1019 = vmatprep.subr.mxu0 0.0
    %1020 = vmatpush2.msra.mxu0 0.0
    %1021 = vmatprep.subr.mxu0 0.0
    %1022 = vmatpush2.msra.mxu0 0.0
    %1023 = vmatprep.subr.mxu0 0.0
    %1024 = vmatpush2.msra.mxu0 0.0
    %1025 = vmatprep.subr.mxu0 0.0
    %1026 = vmatpush2.msra.mxu0 0.0
    %1027 = vmatprep.subr.mxu0 0.0
    %1028 = vmatpush2.msra.mxu0 0.0
    %1029 = vmatprep.subr.mxu0 0.0
    %1030 = vmatpush2.msra.mxu0 0.0
    %1031 = vmatprep.subr.mxu0 0.0
    %1032 = vmatpush2.msra.mxu0 0.0
    %1033 = vmatprep.mubr.f32.mxu0 0.0
    %1034 = vmatmul.mubr.f32.gmra.mxu0 %v860
    %v1035 = vpop.f32.mrf.mxu0
    %v1036 = vadd.f32 0.0, %v1035
    %v1037 = vpop.f32.mrf.mxu0
    %1038 = vdwg.mxu0
    %v1039 = vadd.f32 %v952, %v1036
    %v1040 = vmax.f32 %v1039, 0.0
    %v1041 = vld [vmem:[%s141] sm:$0xff]
    %v1042 = vld [vmem:[%s141 + $0x8] sm:$0xff]
    %v1043 = vld [vmem:[%s141 + $0x10] sm:$0xff]
    %v1044 = vld [vmem:[%s141 + $0x18] sm:$0xff]
    %v1045 = vld [vmem:[%s141 + $0x20] sm:$0xff]
    %v1046 = vld [vmem:[%s141 + $0x28] sm:$0xff]
    %v1047 = vld [vmem:[%s141 + $0x30] sm:$0xff]
    %v1048 = vld [vmem:[%s141 + $0x38] sm:$0xff]
    %v1049 = vld [vmem:[%s141 + $0x40] sm:$0xff]
    %v1050 = vld [vmem:[%s141 + $0x48] sm:$0xff]
    %v1051 = vld [vmem:[%s141 + $0x50] sm:$0xff]
    %v1052 = vld [vmem:[%s141 + $0x58] sm:$0xff]
    %v1053 = vld [vmem:[%s141 + $0x60] sm:$0xff]
    %v1054 = vld [vmem:[%s141 + $0x68] sm:$0xff]
    %v1055 = vld [vmem:[%s141 + $0x70] sm:$0xff]
    %v1056 = vld [vmem:[%s141 + $0x78] sm:$0xff]
    %v1057 = vadd.f32 %v1040, %v948
    %1058 = vmatprep.subr.mxu0 0.0
    %1059 = vmatpush1.msra.mxu0 %v1056
    %1060 = vmatprep.subr.mxu0 0.0
    %1061 = vmatpush1.msra.mxu0 %v1055
    %1062 = vmatprep.subr.mxu0 0.0
    %1063 = vmatpush1.msra.mxu0 %v1054
    %1064 = vmatprep.subr.mxu0 0.0
    %1065 = vmatpush1.msra.mxu0 %v1053
    %1066 = vmatprep.subr.mxu0 0.0
    %1067 = vmatpush1.msra.mxu0 %v1052
    %1068 = vmatprep.subr.mxu0 0.0
    %1069 = vmatpush1.msra.mxu0 %v1051
    %1070 = vmatprep.subr.mxu0 0.0
    %1071 = vmatpush1.msra.mxu0 %v1050
    %1072 = vmatprep.subr.mxu0 0.0
    %1073 = vmatpush1.msra.mxu0 %v1049
    %1074 = vmatprep.subr.mxu0 0.0
    %1075 = vmatpush1.msra.mxu0 %v1048
    %1076 = vmatprep.subr.mxu0 0.0
    %1077 = vmatpush1.msra.mxu0 %v1047
    %1078 = vmatprep.subr.mxu0 0.0
    %1079 = vmatpush1.msra.mxu0 %v1046
    %1080 = vmatprep.subr.mxu0 0.0
    %1081 = vmatpush1.msra.mxu0 %v1045
    %1082 = vmatprep.subr.mxu0 0.0
    %1083 = vmatpush1.msra.mxu0 %v1044
    %1084 = vmatprep.subr.mxu0 0.0
    %1085 = vmatpush1.msra.mxu0 %v1043
    %1086 = vmatprep.subr.mxu0 0.0
    %1087 = vmatpush1.msra.mxu0 %v1042
    %1088 = vmatprep.subr.mxu0 0.0
    %1089 = vmatpush1.msra.mxu0 %v1041
    %1090 = vmatprep.subr.mxu0 0.0
    %1091 = vmatpush2.msra.mxu0 0.0
    %1092 = vmatprep.subr.mxu0 0.0
    %1093 = vmatpush2.msra.mxu0 0.0
    %1094 = vmatprep.subr.mxu0 0.0
    %1095 = vmatpush2.msra.mxu0 0.0
    %1096 = vmatprep.subr.mxu0 0.0
    %1097 = vmatpush2.msra.mxu0 0.0
    %1098 = vmatprep.subr.mxu0 0.0
    %1099 = vmatpush2.msra.mxu0 0.0
    %1100 = vmatprep.subr.mxu0 0.0
    %1101 = vmatpush2.msra.mxu0 0.0
    %1102 = vmatprep.subr.mxu0 0.0
    %1103 = vmatpush2.msra.mxu0 0.0
    %1104 = vmatprep.subr.mxu0 0.0
    %1105 = vmatpush2.msra.mxu0 0.0
    %1106 = vmatprep.subr.mxu0 0.0
    %1107 = vmatpush2.msra.mxu0 0.0
    %1108 = vmatprep.subr.mxu0 0.0
    %1109 = vmatpush2.msra.mxu0 0.0
    %1110 = vmatprep.subr.mxu0 0.0
    %1111 = vmatpush2.msra.mxu0 0.0
    %1112 = vmatprep.subr.mxu0 0.0
    %1113 = vmatpush2.msra.mxu0 0.0
    %1114 = vmatprep.subr.mxu0 0.0
    %1115 = vmatpush2.msra.mxu0 0.0
    %1116 = vmatprep.subr.mxu0 0.0
    %1117 = vmatpush2.msra.mxu0 0.0
    %1118 = vmatprep.subr.mxu0 0.0
    %1119 = vmatpush2.msra.mxu0 0.0
    %1120 = vmatprep.subr.mxu0 0.0
    %1121 = vmatpush2.msra.mxu0 0.0
    %1122 = vmatprep.mubr.f32.mxu0 0.0
    %1123 = vmatmul.mubr.f32.gmra.mxu0 %v1057
    %v1124 = vpop.f32.mrf.mxu0
    %v1125 = vadd.f32 0.0, %v1124
    %v1126 = vpop.f32.mrf.mxu0
    %1127 = vdwg.mxu0
    %v1128 = vmax.f32 %v1125, 0.0
    %s1129 = scalar_lea.vmem [#allocation8], 40
    %1130 = vst [vmem:[%s1129] sm:$0xff] %v1128
    %s1131 = scalar_lea.vmem [#allocation3], 48
    %v1132 = vld [vmem:[%s1131] sm:$0xff]
    %v1133 = vld [vmem:[#allocation6] sm:$0xff]
    %v1134 = vld [vmem:[#allocation6 + $0x8] sm:$0xff]
    %v1135 = vld [vmem:[#allocation6 + $0x10] sm:$0xff]
    %v1136 = vld [vmem:[#allocation6 + $0x18] sm:$0xff]
    %v1137 = vld [vmem:[#allocation6 + $0x20] sm:$0xff]
    %v1138 = vld [vmem:[#allocation6 + $0x28] sm:$0xff]
    %v1139 = vld [vmem:[#allocation6 + $0x30] sm:$0xff]
    %v1140 = vld [vmem:[#allocation6 + $0x38] sm:$0xff]
    %v1141 = vld [vmem:[#allocation6 + $0x40] sm:$0xff]
    %v1142 = vld [vmem:[#allocation6 + $0x48] sm:$0xff]
    %v1143 = vld [vmem:[#allocation6 + $0x50] sm:$0xff]
    %v1144 = vld [vmem:[#allocation6 + $0x58] sm:$0xff]
    %v1145 = vld [vmem:[#allocation6 + $0x60] sm:$0xff]
    %v1146 = vld [vmem:[#allocation6 + $0x68] sm:$0xff]
    %v1147 = vld [vmem:[#allocation6 + $0x70] sm:$0xff]
    %v1148 = vld [vmem:[#allocation6 + $0x78] sm:$0xff]
    %1149 = vmatprep.subr.mxu0 0.0
    %1150 = vmatpush1.msra.mxu0 %v1148
    %1151 = vmatprep.subr.mxu0 0.0
    %1152 = vmatpush1.msra.mxu0 %v1147
    %1153 = vmatprep.subr.mxu0 0.0
    %1154 = vmatpush1.msra.mxu0 %v1146
    %1155 = vmatprep.subr.mxu0 0.0
    %1156 = vmatpush1.msra.mxu0 %v1145
    %1157 = vmatprep.subr.mxu0 0.0
    %1158 = vmatpush1.msra.mxu0 %v1144
    %1159 = vmatprep.subr.mxu0 0.0
    %1160 = vmatpush1.msra.mxu0 %v1143
    %1161 = vmatprep.subr.mxu0 0.0
    %1162 = vmatpush1.msra.mxu0 %v1142
    %1163 = vmatprep.subr.mxu0 0.0
    %1164 = vmatpush1.msra.mxu0 %v1141
    %1165 = vmatprep.subr.mxu0 0.0
    %1166 = vmatpush1.msra.mxu0 %v1140
    %1167 = vmatprep.subr.mxu0 0.0
    %1168 = vmatpush1.msra.mxu0 %v1139
    %1169 = vmatprep.subr.mxu0 0.0
    %1170 = vmatpush1.msra.mxu0 %v1138
    %1171 = vmatprep.subr.mxu0 0.0
    %1172 = vmatpush1.msra.mxu0 %v1137
    %1173 = vmatprep.subr.mxu0 0.0
    %1174 = vmatpush1.msra.mxu0 %v1136
    %1175 = vmatprep.subr.mxu0 0.0
    %1176 = vmatpush1.msra.mxu0 %v1135
    %1177 = vmatprep.subr.mxu0 0.0
    %1178 = vmatpush1.msra.mxu0 %v1134
    %1179 = vmatprep.subr.mxu0 0.0
    %1180 = vmatpush1.msra.mxu0 %v1133
    %1181 = vmatprep.subr.mxu0 0.0
    %1182 = vmatpush2.msra.mxu0 0.0
    %1183 = vmatprep.subr.mxu0 0.0
    %1184 = vmatpush2.msra.mxu0 0.0
    %1185 = vmatprep.subr.mxu0 0.0
    %1186 = vmatpush2.msra.mxu0 0.0
    %1187 = vmatprep.subr.mxu0 0.0
    %1188 = vmatpush2.msra.mxu0 0.0
    %1189 = vmatprep.subr.mxu0 0.0
    %1190 = vmatpush2.msra.mxu0 0.0
    %1191 = vmatprep.subr.mxu0 0.0
    %1192 = vmatpush2.msra.mxu0 0.0
    %1193 = vmatprep.subr.mxu0 0.0
    %1194 = vmatpush2.msra.mxu0 0.0
    %1195 = vmatprep.subr.mxu0 0.0
    %1196 = vmatpush2.msra.mxu0 0.0
    %1197 = vmatprep.subr.mxu0 0.0
    %1198 = vmatpush2.msra.mxu0 0.0
    %1199 = vmatprep.subr.mxu0 0.0
    %1200 = vmatpush2.msra.mxu0 0.0
    %1201 = vmatprep.subr.mxu0 0.0
    %1202 = vmatpush2.msra.mxu0 0.0
    %1203 = vmatprep.subr.mxu0 0.0
    %1204 = vmatpush2.msra.mxu0 0.0
    %1205 = vmatprep.subr.mxu0 0.0
    %1206 = vmatpush2.msra.mxu0 0.0
    %1207 = vmatprep.subr.mxu0 0.0
    %1208 = vmatpush2.msra.mxu0 0.0
    %1209 = vmatprep.subr.mxu0 0.0
    %1210 = vmatpush2.msra.mxu0 0.0
    %1211 = vmatprep.subr.mxu0 0.0
    %1212 = vmatpush2.msra.mxu0 0.0
    %1213 = vmatprep.mubr.f32.mxu0 0.0
    %1214 = vmatmul.mubr.f32.gmra.mxu0 %v1040
    %v1215 = vpop.f32.mrf.mxu0
    %v1216 = vadd.f32 0.0, %v1215
    %v1217 = vpop.f32.mrf.mxu0
    %1218 = vdwg.mxu0
    %v1219 = vadd.f32 %v1132, %v1216
    %v1220 = vmax.f32 %v1219, 0.0
    %v1221 = vld [vmem:[%s141] sm:$0xff]
    %v1222 = vld [vmem:[%s141 + $0x8] sm:$0xff]
    %v1223 = vld [vmem:[%s141 + $0x10] sm:$0xff]
    %v1224 = vld [vmem:[%s141 + $0x18] sm:$0xff]
    %v1225 = vld [vmem:[%s141 + $0x20] sm:$0xff]
    %v1226 = vld [vmem:[%s141 + $0x28] sm:$0xff]
    %v1227 = vld [vmem:[%s141 + $0x30] sm:$0xff]
    %v1228 = vld [vmem:[%s141 + $0x38] sm:$0xff]
    %v1229 = vld [vmem:[%s141 + $0x40] sm:$0xff]
    %v1230 = vld [vmem:[%s141 + $0x48] sm:$0xff]
    %v1231 = vld [vmem:[%s141 + $0x50] sm:$0xff]
    %v1232 = vld [vmem:[%s141 + $0x58] sm:$0xff]
    %v1233 = vld [vmem:[%s141 + $0x60] sm:$0xff]
    %v1234 = vld [vmem:[%s141 + $0x68] sm:$0xff]
    %v1235 = vld [vmem:[%s141 + $0x70] sm:$0xff]
    %v1236 = vld [vmem:[%s141 + $0x78] sm:$0xff]
    %v1237 = vadd.f32 %v1220, %v1128
    %1238 = vmatprep.subr.mxu0 0.0
    %1239 = vmatpush1.msra.mxu0 %v1236
    %1240 = vmatprep.subr.mxu0 0.0
    %1241 = vmatpush1.msra.mxu0 %v1235
    %1242 = vmatprep.subr.mxu0 0.0
    %1243 = vmatpush1.msra.mxu0 %v1234
    %1244 = vmatprep.subr.mxu0 0.0
    %1245 = vmatpush1.msra.mxu0 %v1233
    %1246 = vmatprep.subr.mxu0 0.0
    %1247 = vmatpush1.msra.mxu0 %v1232
    %1248 = vmatprep.subr.mxu0 0.0
    %1249 = vmatpush1.msra.mxu0 %v1231
    %1250 = vmatprep.subr.mxu0 0.0
    %1251 = vmatpush1.msra.mxu0 %v1230
    %1252 = vmatprep.subr.mxu0 0.0
    %1253 = vmatpush1.msra.mxu0 %v1229
    %1254 = vmatprep.subr.mxu0 0.0
    %1255 = vmatpush1.msra.mxu0 %v1228
    %1256 = vmatprep.subr.mxu0 0.0
    %1257 = vmatpush1.msra.mxu0 %v1227
    %1258 = vmatprep.subr.mxu0 0.0
    %1259 = vmatpush1.msra.mxu0 %v1226
    %1260 = vmatprep.subr.mxu0 0.0
    %1261 = vmatpush1.msra.mxu0 %v1225
    %1262 = vmatprep.subr.mxu0 0.0
    %1263 = vmatpush1.msra.mxu0 %v1224
    %1264 = vmatprep.subr.mxu0 0.0
    %1265 = vmatpush1.msra.mxu0 %v1223
    %1266 = vmatprep.subr.mxu0 0.0
    %1267 = vmatpush1.msra.mxu0 %v1222
    %1268 = vmatprep.subr.mxu0 0.0
    %1269 = vmatpush1.msra.mxu0 %v1221
    %1270 = vmatprep.subr.mxu0 0.0
    %1271 = vmatpush2.msra.mxu0 0.0
    %1272 = vmatprep.subr.mxu0 0.0
    %1273 = vmatpush2.msra.mxu0 0.0
    %1274 = vmatprep.subr.mxu0 0.0
    %1275 = vmatpush2.msra.mxu0 0.0
    %1276 = vmatprep.subr.mxu0 0.0
    %1277 = vmatpush2.msra.mxu0 0.0
    %1278 = vmatprep.subr.mxu0 0.0
    %1279 = vmatpush2.msra.mxu0 0.0
    %1280 = vmatprep.subr.mxu0 0.0
    %1281 = vmatpush2.msra.mxu0 0.0
    %1282 = vmatprep.subr.mxu0 0.0
    %1283 = vmatpush2.msra.mxu0 0.0
    %1284 = vmatprep.subr.mxu0 0.0
    %1285 = vmatpush2.msra.mxu0 0.0
    %1286 = vmatprep.subr.mxu0 0.0
    %1287 = vmatpush2.msra.mxu0 0.0
    %1288 = vmatprep.subr.mxu0 0.0
    %1289 = vmatpush2.msra.mxu0 0.0
    %1290 = vmatprep.subr.mxu0 0.0
    %1291 = vmatpush2.msra.mxu0 0.0
    %1292 = vmatprep.subr.mxu0 0.0
    %1293 = vmatpush2.msra.mxu0 0.0
    %1294 = vmatprep.subr.mxu0 0.0
    %1295 = vmatpush2.msra.mxu0 0.0
    %1296 = vmatprep.subr.mxu0 0.0
    %1297 = vmatpush2.msra.mxu0 0.0
    %1298 = vmatprep.subr.mxu0 0.0
    %1299 = vmatpush2.msra.mxu0 0.0
    %1300 = vmatprep.subr.mxu0 0.0
    %1301 = vmatpush2.msra.mxu0 0.0
    %1302 = vmatprep.mubr.f32.mxu0 0.0
    %1303 = vmatmul.mubr.f32.gmra.mxu0 %v1237
    %v1304 = vpop.f32.mrf.mxu0
    %v1305 = vadd.f32 0.0, %v1304
    %v1306 = vpop.f32.mrf.mxu0
    %1307 = vdwg.mxu0
    %v1308 = vmax.f32 %v1305, 0.0
    %s1309 = scalar_lea.vmem [#allocation8], 48
    %1310 = vst [vmem:[%s1309] sm:$0xff] %v1308
    %s1311 = scalar_lea.vmem [#allocation3], 56
    %v1312 = vld [vmem:[%s1311] sm:$0xff]
    %v1313 = vld [vmem:[#allocation6] sm:$0xff]
    %v1314 = vld [vmem:[#allocation6 + $0x8] sm:$0xff]
    %v1315 = vld [vmem:[#allocation6 + $0x10] sm:$0xff]
    %v1316 = vld [vmem:[#allocation6 + $0x18] sm:$0xff]
    %v1317 = vld [vmem:[#allocation6 + $0x20] sm:$0xff]
    %v1318 = vld [vmem:[#allocation6 + $0x28] sm:$0xff]
    %v1319 = vld [vmem:[#allocation6 + $0x30] sm:$0xff]
    %v1320 = vld [vmem:[#allocation6 + $0x38] sm:$0xff]
    %v1321 = vld [vmem:[#allocation6 + $0x40] sm:$0xff]
    %v1322 = vld [vmem:[#allocation6 + $0x48] sm:$0xff]
    %v1323 = vld [vmem:[#allocation6 + $0x50] sm:$0xff]
    %v1324 = vld [vmem:[#allocation6 + $0x58] sm:$0xff]
    %v1325 = vld [vmem:[#allocation6 + $0x60] sm:$0xff]
    %v1326 = vld [vmem:[#allocation6 + $0x68] sm:$0xff]
    %v1327 = vld [vmem:[#allocation6 + $0x70] sm:$0xff]
    %v1328 = vld [vmem:[#allocation6 + $0x78] sm:$0xff]
    %1329 = vmatprep.subr.mxu0 0.0
    %1330 = vmatpush1.msra.mxu0 %v1328
    %1331 = vmatprep.subr.mxu0 0.0
    %1332 = vmatpush1.msra.mxu0 %v1327
    %1333 = vmatprep.subr.mxu0 0.0
    %1334 = vmatpush1.msra.mxu0 %v1326
    %1335 = vmatprep.subr.mxu0 0.0
    %1336 = vmatpush1.msra.mxu0 %v1325
    %1337 = vmatprep.subr.mxu0 0.0
    %1338 = vmatpush1.msra.mxu0 %v1324
    %1339 = vmatprep.subr.mxu0 0.0
    %1340 = vmatpush1.msra.mxu0 %v1323
    %1341 = vmatprep.subr.mxu0 0.0
    %1342 = vmatpush1.msra.mxu0 %v1322
    %1343 = vmatprep.subr.mxu0 0.0
    %1344 = vmatpush1.msra.mxu0 %v1321
    %1345 = vmatprep.subr.mxu0 0.0
    %1346 = vmatpush1.msra.mxu0 %v1320
    %1347 = vmatprep.subr.mxu0 0.0
    %1348 = vmatpush1.msra.mxu0 %v1319
    %1349 = vmatprep.subr.mxu0 0.0
    %1350 = vmatpush1.msra.mxu0 %v1318
    %1351 = vmatprep.subr.mxu0 0.0
    %1352 = vmatpush1.msra.mxu0 %v1317
    %1353 = vmatprep.subr.mxu0 0.0
    %1354 = vmatpush1.msra.mxu0 %v1316
    %1355 = vmatprep.subr.mxu0 0.0
    %1356 = vmatpush1.msra.mxu0 %v1315
    %1357 = vmatprep.subr.mxu0 0.0
    %1358 = vmatpush1.msra.mxu0 %v1314
    %1359 = vmatprep.subr.mxu0 0.0
    %1360 = vmatpush1.msra.mxu0 %v1313
    %1361 = vmatprep.subr.mxu0 0.0
    %1362 = vmatpush2.msra.mxu0 0.0
    %1363 = vmatprep.subr.mxu0 0.0
    %1364 = vmatpush2.msra.mxu0 0.0
    %1365 = vmatprep.subr.mxu0 0.0
    %1366 = vmatpush2.msra.mxu0 0.0
    %1367 = vmatprep.subr.mxu0 0.0
    %1368 = vmatpush2.msra.mxu0 0.0
    %1369 = vmatprep.subr.mxu0 0.0
    %1370 = vmatpush2.msra.mxu0 0.0
    %1371 = vmatprep.subr.mxu0 0.0
    %1372 = vmatpush2.msra.mxu0 0.0
    %1373 = vmatprep.subr.mxu0 0.0
    %1374 = vmatpush2.msra.mxu0 0.0
    %1375 = vmatprep.subr.mxu0 0.0
    %1376 = vmatpush2.msra.mxu0 0.0
    %1377 = vmatprep.subr.mxu0 0.0
    %1378 = vmatpush2.msra.mxu0 0.0
    %1379 = vmatprep.subr.mxu0 0.0
    %1380 = vmatpush2.msra.mxu0 0.0
    %1381 = vmatprep.subr.mxu0 0.0
    %1382 = vmatpush2.msra.mxu0 0.0
    %1383 = vmatprep.subr.mxu0 0.0
    %1384 = vmatpush2.msra.mxu0 0.0
    %1385 = vmatprep.subr.mxu0 0.0
    %1386 = vmatpush2.msra.mxu0 0.0
    %1387 = vmatprep.subr.mxu0 0.0
    %1388 = vmatpush2.msra.mxu0 0.0
    %1389 = vmatprep.subr.mxu0 0.0
    %1390 = vmatpush2.msra.mxu0 0.0
    %1391 = vmatprep.subr.mxu0 0.0
    %1392 = vmatpush2.msra.mxu0 0.0
    %1393 = vmatprep.mubr.f32.mxu0 0.0
    %1394 = vmatmul.mubr.f32.gmra.mxu0 %v1220
    %v1395 = vpop.f32.mrf.mxu0
    %v1396 = vadd.f32 0.0, %v1395
    %v1397 = vpop.f32.mrf.mxu0
    %1398 = vdwg.mxu0
    %v1399 = vadd.f32 %v1312, %v1396
    %v1400 = vmax.f32 %v1399, 0.0
    %v1401 = vld [vmem:[%s141] sm:$0xff]
    %v1402 = vld [vmem:[%s141 + $0x8] sm:$0xff]
    %v1403 = vld [vmem:[%s141 + $0x10] sm:$0xff]
    %v1404 = vld [vmem:[%s141 + $0x18] sm:$0xff]
    %v1405 = vld [vmem:[%s141 + $0x20] sm:$0xff]
    %v1406 = vld [vmem:[%s141 + $0x28] sm:$0xff]
    %v1407 = vld [vmem:[%s141 + $0x30] sm:$0xff]
    %v1408 = vld [vmem:[%s141 + $0x38] sm:$0xff]
    %v1409 = vld [vmem:[%s141 + $0x40] sm:$0xff]
    %v1410 = vld [vmem:[%s141 + $0x48] sm:$0xff]
    %v1411 = vld [vmem:[%s141 + $0x50] sm:$0xff]
    %v1412 = vld [vmem:[%s141 + $0x58] sm:$0xff]
    %v1413 = vld [vmem:[%s141 + $0x60] sm:$0xff]
    %v1414 = vld [vmem:[%s141 + $0x68] sm:$0xff]
    %v1415 = vld [vmem:[%s141 + $0x70] sm:$0xff]
    %v1416 = vld [vmem:[%s141 + $0x78] sm:$0xff]
    %v1417 = vadd.f32 %v1400, %v1308
    %1418 = vmatprep.subr.mxu0 0.0
    %1419 = vmatpush1.msra.mxu0 %v1416
    %1420 = vmatprep.subr.mxu0 0.0
    %1421 = vmatpush1.msra.mxu0 %v1415
    %1422 = vmatprep.subr.mxu0 0.0
    %1423 = vmatpush1.msra.mxu0 %v1414
    %1424 = vmatprep.subr.mxu0 0.0
    %1425 = vmatpush1.msra.mxu0 %v1413
    %1426 = vmatprep.subr.mxu0 0.0
    %1427 = vmatpush1.msra.mxu0 %v1412
    %1428 = vmatprep.subr.mxu0 0.0
    %1429 = vmatpush1.msra.mxu0 %v1411
    %1430 = vmatprep.subr.mxu0 0.0
    %1431 = vmatpush1.msra.mxu0 %v1410
    %1432 = vmatprep.subr.mxu0 0.0
    %1433 = vmatpush1.msra.mxu0 %v1409
    %1434 = vmatprep.subr.mxu0 0.0
    %1435 = vmatpush1.msra.mxu0 %v1408
    %1436 = vmatprep.subr.mxu0 0.0
    %1437 = vmatpush1.msra.mxu0 %v1407
    %1438 = vmatprep.subr.mxu0 0.0
    %1439 = vmatpush1.msra.mxu0 %v1406
    %1440 = vmatprep.subr.mxu0 0.0
    %1441 = vmatpush1.msra.mxu0 %v1405
    %1442 = vmatprep.subr.mxu0 0.0
    %1443 = vmatpush1.msra.mxu0 %v1404
    %1444 = vmatprep.subr.mxu0 0.0
    %1445 = vmatpush1.msra.mxu0 %v1403
    %1446 = vmatprep.subr.mxu0 0.0
    %1447 = vmatpush1.msra.mxu0 %v1402
    %1448 = vmatprep.subr.mxu0 0.0
    %1449 = vmatpush1.msra.mxu0 %v1401
    %1450 = vmatprep.subr.mxu0 0.0
    %1451 = vmatpush2.msra.mxu0 0.0
    %1452 = vmatprep.subr.mxu0 0.0
    %1453 = vmatpush2.msra.mxu0 0.0
    %1454 = vmatprep.subr.mxu0 0.0
    %1455 = vmatpush2.msra.mxu0 0.0
    %1456 = vmatprep.subr.mxu0 0.0
    %1457 = vmatpush2.msra.mxu0 0.0
    %1458 = vmatprep.subr.mxu0 0.0
    %1459 = vmatpush2.msra.mxu0 0.0
    %1460 = vmatprep.subr.mxu0 0.0
    %1461 = vmatpush2.msra.mxu0 0.0
    %1462 = vmatprep.subr.mxu0 0.0
    %1463 = vmatpush2.msra.mxu0 0.0
    %1464 = vmatprep.subr.mxu0 0.0
    %1465 = vmatpush2.msra.mxu0 0.0
    %1466 = vmatprep.subr.mxu0 0.0
    %1467 = vmatpush2.msra.mxu0 0.0
    %1468 = vmatprep.subr.mxu0 0.0
    %1469 = vmatpush2.msra.mxu0 0.0
    %1470 = vmatprep.subr.mxu0 0.0
    %1471 = vmatpush2.msra.mxu0 0.0
    %1472 = vmatprep.subr.mxu0 0.0
    %1473 = vmatpush2.msra.mxu0 0.0
    %1474 = vmatprep.subr.mxu0 0.0
    %1475 = vmatpush2.msra.mxu0 0.0
    %1476 = vmatprep.subr.mxu0 0.0
    %1477 = vmatpush2.msra.mxu0 0.0
    %1478 = vmatprep.subr.mxu0 0.0
    %1479 = vmatpush2.msra.mxu0 0.0
    %1480 = vmatprep.subr.mxu0 0.0
    %1481 = vmatpush2.msra.mxu0 0.0
    %1482 = vmatprep.mubr.f32.mxu0 0.0
    %1483 = vmatmul.mubr.f32.gmra.mxu0 %v1417
    %v1484 = vpop.f32.mrf.mxu0
    %v1485 = vadd.f32 0.0, %v1484
    %v1486 = vpop.f32.mrf.mxu0
    %1487 = vdwg.mxu0
    %v1488 = vmax.f32 %v1485, 0.0
    %s1489 = scalar_lea.vmem [#allocation8], 56
    %1490 = vst [vmem:[%s1489] sm:$0xff] %v1488
    %1491 = vst [vmem:[#allocation2] sm:$0xff] %v1400
    %1492 = vst [vmem:[%s50] sm:$0xff] %v1488
    // Predicated region
    $region22: #{tpu_custom_call.1} parent=1 // pred_check
      %p1493 = pneg %p43
    $region23: #{tpu_custom_call.1} parent=1 // pred_check_branch
      %1495 = sbr.rel (%p1493) target = $region25
    $region24: #{tpu_custom_call.1} parent=1 // pred_region
      %v1496 = vld [vmem:[#allocation2] sm:$0xff]
      %v1497 = vld [vmem:[#allocation2 + $0x8] sm:$0xff]
      %1498 = vst [vmem:[#allocation9] sm:$0xff] %v1496
      %1499 = vst [vmem:[#allocation9 + $0x8] sm:$0xff] %v1497
    $region25: #{tpu_custom_call.1} parent=1 // pred_fallthru
      _
    // Predicated region
    $region26: #{tpu_custom_call.1} parent=1 // pred_check
      _
    $region27: #{tpu_custom_call.1} parent=1 // pred_check_branch
      %1501 = sbr.rel (0) target = $region29
    $region28: #{tpu_custom_call.1} parent=1 // pred_region
      %s1503 = ssub.s32 1024, 1024
      %1504 = vsyncadd [#allocation5], %s1503
      %s1505 = sshll.u32 [#allocation8], 4
      %s1506 = int_to_ptr.vmem [resolvable:$true] %s1505
      %1511 = dma.vmem_to_hbm [thread:$0]  %s1506, 1024, %s2, [#allocation5], 128, 128, 8
    $region29: #{tpu_custom_call.1} parent=1 // pred_fallthru
      _
    // Predicated region
    $region30: #{tpu_custom_call.1} parent=1 // pred_check
      _
    $region31: #{tpu_custom_call.1} parent=1 // pred_check_branch
      %1513 = sbr.rel (0) target = $region33
    $region32: #{tpu_custom_call.1} parent=1 // pred_region
      %s1515 = ssub.s32 256, 256
      %1516 = vsyncadd [#allocation10], %s1515
      %s1517 = sshll.u32 [#allocation9], 4
      %s1518 = int_to_ptr.vmem [resolvable:$true] %s1517
      %1523 = dma.vmem_to_hbm [thread:$0]  %s1518, 256, %s3, [#allocation10], 128, 128, 8
    $region33: #{tpu_custom_call.1} parent=1 // pred_fallthru
      _
    // Predicated region
    $region34: #{tpu_custom_call.1} parent=1 // pred_check
      _
    $region35: #{tpu_custom_call.1} parent=1 // pred_check_branch
      %1525 = sbr.rel (0) target = $region37
    $region36: #{tpu_custom_call.1} parent=1 // pred_region
      %1526 = dma.done [#allocation5], 1024
    $region37: #{tpu_custom_call.1} parent=1 // pred_fallthru
      _
    // Predicated region
    $region38: #{tpu_custom_call.1} parent=1 // pred_check
      _
    $region39: #{tpu_custom_call.1} parent=1 // pred_check_branch
      %1528 = sbr.rel (0) target = $region41
    $region40: #{tpu_custom_call.1} parent=1 // pred_region
      %1529 = dma.done [#allocation10], 256
    $region41: #{tpu_custom_call.1} parent=1 // pred_fallthru
      _
    %1530 = vsyncpa [#allocation4], 1
    %1531 = vsyncpa [#allocation7], 1
    %1532 = vsyncpa [#allocation5], 1
    %1533 = vsyncpa [#allocation10], 1

</llo_original>
